<compile_context>
chip_gen: v6e
topology: v6e:2x2x1
jax: 0.10.0
libtpu: 0.0.40
codegen_flags: <defaults>
</compile_context>

<pallas_src>
import math

import jax
import jax.numpy as jnp
from jax.experimental import pallas as pl
from jax.experimental.pallas import tpu as pltpu

_SUBLANE = 8


def rnn_forward_kernel(x2d_ref,
                       wih0_ref, whh0_ref, b0_ref,
                       wih1_ref, whh1_ref, b1_ref,
                       wlin_ref, blin_ref,
                       out_ref):
    """2-layer relu RNN recurrence + final Linear, all resident in VMEM.

    x2d_ref  : (T*B, D)  time-major input, flattened in the wrapper
    wih0_ref : (D, H)    layer-0 input->hidden (transposed)
    whh0_ref : (H, H)    layer-0 hidden->hidden (transposed)
    b0_ref   : (1, H)    layer-0 combined bias (b_ih0 + b_hh0)
    wih1_ref : (H, H)    layer-1 input->hidden (transposed)
    whh1_ref : (H, H)    layer-1 hidden->hidden (transposed)
    b1_ref   : (1, H)    layer-1 combined bias (b_ih1 + b_hh1)
    wlin_ref : (H, O)    final linear weight (transposed)
    blin_ref : (1, O)    final linear bias
    out_ref  : (B, O)    output = Linear(last-timestep top-layer hidden)

    B here is the sublane-padded batch (multiple of 8).
    """
    TB, D = x2d_ref.shape
    H = whh0_ref.shape[0]
    B = out_ref.shape[0]
    T = TB // B

    # --- Hoisted layer-0 input projection (one big matmul, bias folded in) ---
    xproj = (jnp.dot(x2d_ref[...], wih0_ref[...],
                     preferred_element_type=jnp.float32)
             + b0_ref[...])                                    # (T*B, H)

    # Weights / biases loaded & broadcast once, outside the recurrence.
    whh0 = whh0_ref[...]                                       # (H, H)
    wih1 = wih1_ref[...]                                       # (H, H)
    whh1 = whh1_ref[...]                                       # (H, H)
    b1 = jnp.broadcast_to(b1_ref[...], (B, H))                 # hoisted bcast

    # Peeled t = 0: h0 = h1 = 0, so both recurrent matmuls drop out.
    h0 = jnp.maximum(xproj[0:B, :], 0.0)
    h1 = jnp.maximum(
        jnp.dot(h0, wih1, preferred_element_type=jnp.float32) + b1, 0.0)

    # Fully unrolled recurrence (T static, two (B,H) vregs of live state).
    # Slices xproj[t*B:(t+1)*B] are static and sublane-aligned (B % 8 == 0).
    for t in range(1, T):
        # rec1 depends only on h1(t-1): issues alongside layer-0's matmul.
        rec1 = jnp.dot(h1, whh1, preferred_element_type=jnp.float32)
        h0 = jnp.maximum(
            xproj[t * B:(t + 1) * B, :]
            + jnp.dot(h0, whh0, preferred_element_type=jnp.float32),
            0.0)
        h1 = jnp.maximum(
            jnp.dot(h0, wih1, preferred_element_type=jnp.float32) + rec1 + b1,
            0.0)

    # Final linear on the last-timestep top-layer hidden state.
    # O=1 -> single masked store; not worth lane-padding at this size.
    out_ref[...] = (jnp.dot(h1, wlin_ref[...],
                            preferred_element_type=jnp.float32)
                    + blin_ref[...])


@jax.jit
def rnn_model_forward(x, params):
    """x: (B, T, D) batch-first, like the PyTorch module.

    Returns jnp.squeeze(linear_out), mirroring PyTorch's `out.squeeze()`
    (note: if B == 1 this also collapses the batch dim, exactly as PyTorch).
    """
    B, T, D = x.shape
    O = params["w_lin"].shape[0]

    # Pad batch to a full sublane tile so every (B, H) slab is one (8,128)
    # tile inside the kernel (padded rows are zeros; compute on them is free).
    B_pad = ((B + _SUBLANE - 1) // _SUBLANE) * _SUBLANE
    x_p = jnp.pad(x, ((0, B_pad - B), (0, 0), (0, 0)))

    # Time-major then flatten *in XLA* (before the DMA) so the kernel never
    # has to do an in-VMEM relayout.
    x2d = jnp.transpose(x_p, (1, 0, 2)).reshape(T * B_pad, D)

    # All of this param prep constant-folds / fuses under jit.
    wih0 = params["w_ih0"].T                                   # (D, H)
    whh0 = params["w_hh0"].T                                   # (H, H)
    b0 = (params["b_ih0"] + params["b_hh0"])[None, :]          # (1, H)
    wih1 = params["w_ih1"].T                                   # (H, H)
    whh1 = params["w_hh1"].T                                   # (H, H)
    b1 = (params["b_ih1"] + params["b_hh1"])[None, :]          # (1, H)
    wlin = params["w_lin"].T                                   # (H, O)
    blin = params["b_lin"][None, :]                            # (1, O)

    vmem = pl.BlockSpec(memory_space=pltpu.MemorySpace.VMEM)

    out = pl.pallas_call(
        rnn_forward_kernel,
        out_shape=jax.ShapeDtypeStruct((B_pad, O), jnp.float32),
        in_specs=[vmem] * 9,
        out_specs=vmem,
    )(x2d, wih0, whh0, b0, wih1, whh1, b1, wlin, blin)

    return jnp.squeeze(out[:B])


def init_params(key, input_dim, hidden_dim, output_dim):
    """Deterministic init mirroring PyTorch's U(-1/sqrt(H), 1/sqrt(H)) scheme."""
    stdv = 1.0 / math.sqrt(hidden_dim)
    ks = jax.random.split(key, 10)
    u = lambda k, shape: jax.random.uniform(k, shape, jnp.float32, -stdv, stdv)
    return {
        # nn.RNN layer 0
        "w_ih0": u(ks[0], (hidden_dim, input_dim)),
        "w_hh0": u(ks[1], (hidden_dim, hidden_dim)),
        "b_ih0": u(ks[2], (hidden_dim,)),
        "b_hh0": u(ks[3], (hidden_dim,)),
        # nn.RNN layer 1
        "w_ih1": u(ks[4], (hidden_dim, hidden_dim)),
        "w_hh1": u(ks[5], (hidden_dim, hidden_dim)),
        "b_ih1": u(ks[6], (hidden_dim,)),
        "b_hh1": u(ks[7], (hidden_dim,)),
        # compute_linear
        "w_lin": u(ks[8], (output_dim, hidden_dim)),
        "b_lin": u(ks[9], (output_dim,)),
    }


def rnn_model_reference(x, params):
    """Pure-JAX reference of the PyTorch forward (for correctness check)."""
    B, T, D = x.shape
    H = params["w_hh0"].shape[0]
    h0 = jnp.zeros((B, H), jnp.float32)
    h1 = jnp.zeros((B, H), jnp.float32)
    for t in range(T):
        xt = x[:, t, :]
        h0 = jax.nn.relu(xt @ params["w_ih0"].T + params["b_ih0"]
                         + h0 @ params["w_hh0"].T + params["b_hh0"])
        h1 = jax.nn.relu(h0 @ params["w_ih1"].T + params["b_ih1"]
                         + h1 @ params["w_hh1"].T + params["b_hh1"])
    out = h1 @ params["w_lin"].T + params["b_lin"]
    return jnp.squeeze(out)


if __name__ == "__main__":
    # Small shapes consistent with the module: batch=4, seq=8, input=8,
    # hidden=32, layers=2, output=1.
    batch, seq_dim, input_dim, hidden_dim, output_dim = 4, 8, 8, 32, 1

    key = jax.random.PRNGKey(0)
    k_x, k_p = jax.random.split(key)
    x = jax.random.normal(k_x, (batch, seq_dim, input_dim), jnp.float32)
    params = init_params(k_p, input_dim, hidden_dim, output_dim)

    out = jax.block_until_ready(rnn_model_forward(x, params))
    ref = jax.block_until_ready(rnn_model_reference(x, params))

    assert out.shape == (batch,), f"unexpected output shape {out.shape}"
    assert jnp.allclose(out, ref, atol=1e-5, rtol=1e-5), "kernel/reference mismatch"

    print("KERNEL_OK")
</pallas_src>

<mosaic_0001>
module attributes {stable_mosaic.version = 11 : i64} {
  func.func @rnn_forward_kernel(%arg0: memref<64x8xf32, #tpu.memory_space<vmem>>, %arg1: memref<8x32xf32, #tpu.memory_space<vmem>>, %arg2: memref<32x32xf32, #tpu.memory_space<vmem>>, %arg3: memref<1x32xf32, #tpu.memory_space<vmem>>, %arg4: memref<32x32xf32, #tpu.memory_space<vmem>>, %arg5: memref<32x32xf32, #tpu.memory_space<vmem>>, %arg6: memref<1x32xf32, #tpu.memory_space<vmem>>, %arg7: memref<32x1xf32, #tpu.memory_space<vmem>>, %arg8: memref<1x1xf32, #tpu.memory_space<vmem>>, %arg9: memref<8x1xf32, #tpu.memory_space<vmem>>) attributes {dimension_semantics = [], scalar_prefetch = 0 : i64, scratch_operands = 0 : i64, tpu.core_type = #tpu.core_type<tc>} {
    %c0 = arith.constant 0 : index
    %c0_0 = arith.constant 0 : index
    %0 = vector.load %arg0[%c0, %c0_0] : memref<64x8xf32, #tpu.memory_space<vmem>>, vector<64x8xf32>
    %c0_1 = arith.constant 0 : index
    %c0_2 = arith.constant 0 : index
    %1 = vector.load %arg1[%c0_1, %c0_2] : memref<8x32xf32, #tpu.memory_space<vmem>>, vector<8x32xf32>
    %cst = arith.constant dense<0.000000e+00> : vector<64x32xf32>
    %2 = tpu.matmul %0, %1, %cst {dimension_numbers = #tpu.dot_dimension_numbers<[1], [0], [0], [1], [0, 0, 1, 1], [], []>} : vector<64x8xf32>, vector<8x32xf32>, vector<64x32xf32> -> vector<64x32xf32>
    %c0_3 = arith.constant 0 : index
    %c0_4 = arith.constant 0 : index
    %3 = vector.load %arg3[%c0_3, %c0_4] : memref<1x32xf32, #tpu.memory_space<vmem>>, vector<1x32xf32>
    %4 = vector.broadcast %3 : vector<1x32xf32> to vector<64x32xf32>
    %5 = arith.addf %2, %4 : vector<64x32xf32>
    %c0_5 = arith.constant 0 : index
    %c0_6 = arith.constant 0 : index
    %6 = vector.load %arg2[%c0_5, %c0_6] : memref<32x32xf32, #tpu.memory_space<vmem>>, vector<32x32xf32>
    %c0_7 = arith.constant 0 : index
    %c0_8 = arith.constant 0 : index
    %7 = vector.load %arg4[%c0_7, %c0_8] : memref<32x32xf32, #tpu.memory_space<vmem>>, vector<32x32xf32>
    %c0_9 = arith.constant 0 : index
    %c0_10 = arith.constant 0 : index
    %8 = vector.load %arg5[%c0_9, %c0_10] : memref<32x32xf32, #tpu.memory_space<vmem>>, vector<32x32xf32>
    %c0_11 = arith.constant 0 : index
    %c0_12 = arith.constant 0 : index
    %9 = vector.load %arg6[%c0_11, %c0_12] : memref<1x32xf32, #tpu.memory_space<vmem>>, vector<1x32xf32>
    %10 = vector.shape_cast %9 : vector<1x32xf32> to vector<1x32xf32>
    %11 = vector.broadcast %10 : vector<1x32xf32> to vector<8x32xf32>
    %12 = vector.extract_strided_slice %5 {offsets = [0, 0], sizes = [8, 32], strides = [1, 1]} : vector<64x32xf32> to vector<8x32xf32>
    %cst_13 = arith.constant 0.000000e+00 : f32
    %13 = vector.broadcast %cst_13 : f32 to vector<8x32xf32>
    %14 = arith.maximumf %12, %13 : vector<8x32xf32>
    %cst_14 = arith.constant dense<0.000000e+00> : vector<8x32xf32>
    %15 = tpu.matmul %14, %7, %cst_14 {dimension_numbers = #tpu.dot_dimension_numbers<[1], [0], [0], [1], [0, 0, 1, 1], [], []>} : vector<8x32xf32>, vector<32x32xf32>, vector<8x32xf32> -> vector<8x32xf32>
    %16 = arith.addf %15, %11 : vector<8x32xf32>
    %cst_15 = arith.constant 0.000000e+00 : f32
    %17 = vector.broadcast %cst_15 : f32 to vector<8x32xf32>
    %18 = arith.maximumf %16, %17 : vector<8x32xf32>
    %cst_16 = arith.constant dense<0.000000e+00> : vector<8x32xf32>
    %19 = tpu.matmul %18, %8, %cst_16 {dimension_numbers = #tpu.dot_dimension_numbers<[1], [0], [0], [1], [0, 0, 1, 1], [], []>} : vector<8x32xf32>, vector<32x32xf32>, vector<8x32xf32> -> vector<8x32xf32>
    %20 = vector.extract_strided_slice %5 {offsets = [8, 0], sizes = [8, 32], strides = [1, 1]} : vector<64x32xf32> to vector<8x32xf32>
    %cst_17 = arith.constant dense<0.000000e+00> : vector<8x32xf32>
    %21 = tpu.matmul %14, %6, %cst_17 {dimension_numbers = #tpu.dot_dimension_numbers<[1], [0], [0], [1], [0, 0, 1, 1], [], []>} : vector<8x32xf32>, vector<32x32xf32>, vector<8x32xf32> -> vector<8x32xf32>
    %22 = arith.addf %20, %21 : vector<8x32xf32>
    %cst_18 = arith.constant 0.000000e+00 : f32
    %23 = vector.broadcast %cst_18 : f32 to vector<8x32xf32>
    %24 = arith.maximumf %22, %23 : vector<8x32xf32>
    %cst_19 = arith.constant dense<0.000000e+00> : vector<8x32xf32>
    %25 = tpu.matmul %24, %7, %cst_19 {dimension_numbers = #tpu.dot_dimension_numbers<[1], [0], [0], [1], [0, 0, 1, 1], [], []>} : vector<8x32xf32>, vector<32x32xf32>, vector<8x32xf32> -> vector<8x32xf32>
    %26 = arith.addf %25, %19 : vector<8x32xf32>
    %27 = arith.addf %26, %11 : vector<8x32xf32>
    %cst_20 = arith.constant 0.000000e+00 : f32
    %28 = vector.broadcast %cst_20 : f32 to vector<8x32xf32>
    %29 = arith.maximumf %27, %28 : vector<8x32xf32>
    %cst_21 = arith.constant dense<0.000000e+00> : vector<8x32xf32>
    %30 = tpu.matmul %29, %8, %cst_21 {dimension_numbers = #tpu.dot_dimension_numbers<[1], [0], [0], [1], [0, 0, 1, 1], [], []>} : vector<8x32xf32>, vector<32x32xf32>, vector<8x32xf32> -> vector<8x32xf32>
    %31 = vector.extract_strided_slice %5 {offsets = [16, 0], sizes = [8, 32], strides = [1, 1]} : vector<64x32xf32> to vector<8x32xf32>
    %cst_22 = arith.constant dense<0.000000e+00> : vector<8x32xf32>
    %32 = tpu.matmul %24, %6, %cst_22 {dimension_numbers = #tpu.dot_dimension_numbers<[1], [0], [0], [1], [0, 0, 1, 1], [], []>} : vector<8x32xf32>, vector<32x32xf32>, vector<8x32xf32> -> vector<8x32xf32>
    %33 = arith.addf %31, %32 : vector<8x32xf32>
    %cst_23 = arith.constant 0.000000e+00 : f32
    %34 = vector.broadcast %cst_23 : f32 to vector<8x32xf32>
    %35 = arith.maximumf %33, %34 : vector<8x32xf32>
    %cst_24 = arith.constant dense<0.000000e+00> : vector<8x32xf32>
    %36 = tpu.matmul %35, %7, %cst_24 {dimension_numbers = #tpu.dot_dimension_numbers<[1], [0], [0], [1], [0, 0, 1, 1], [], []>} : vector<8x32xf32>, vector<32x32xf32>, vector<8x32xf32> -> vector<8x32xf32>
    %37 = arith.addf %36, %30 : vector<8x32xf32>
    %38 = arith.addf %37, %11 : vector<8x32xf32>
    %cst_25 = arith.constant 0.000000e+00 : f32
    %39 = vector.broadcast %cst_25 : f32 to vector<8x32xf32>
    %40 = arith.maximumf %38, %39 : vector<8x32xf32>
    %cst_26 = arith.constant dense<0.000000e+00> : vector<8x32xf32>
    %41 = tpu.matmul %40, %8, %cst_26 {dimension_numbers = #tpu.dot_dimension_numbers<[1], [0], [0], [1], [0, 0, 1, 1], [], []>} : vector<8x32xf32>, vector<32x32xf32>, vector<8x32xf32> -> vector<8x32xf32>
    %42 = vector.extract_strided_slice %5 {offsets = [24, 0], sizes = [8, 32], strides = [1, 1]} : vector<64x32xf32> to vector<8x32xf32>
    %cst_27 = arith.constant dense<0.000000e+00> : vector<8x32xf32>
    %43 = tpu.matmul %35, %6, %cst_27 {dimension_numbers = #tpu.dot_dimension_numbers<[1], [0], [0], [1], [0, 0, 1, 1], [], []>} : vector<8x32xf32>, vector<32x32xf32>, vector<8x32xf32> -> vector<8x32xf32>
    %44 = arith.addf %42, %43 : vector<8x32xf32>
    %cst_28 = arith.constant 0.000000e+00 : f32
    %45 = vector.broadcast %cst_28 : f32 to vector<8x32xf32>
    %46 = arith.maximumf %44, %45 : vector<8x32xf32>
    %cst_29 = arith.constant dense<0.000000e+00> : vector<8x32xf32>
    %47 = tpu.matmul %46, %7, %cst_29 {dimension_numbers = #tpu.dot_dimension_numbers<[1], [0], [0], [1], [0, 0, 1, 1], [], []>} : vector<8x32xf32>, vector<32x32xf32>, vector<8x32xf32> -> vector<8x32xf32>
    %48 = arith.addf %47, %41 : vector<8x32xf32>
    %49 = arith.addf %48, %11 : vector<8x32xf32>
    %cst_30 = arith.constant 0.000000e+00 : f32
    %50 = vector.broadcast %cst_30 : f32 to vector<8x32xf32>
    %51 = arith.maximumf %49, %50 : vector<8x32xf32>
    %cst_31 = arith.constant dense<0.000000e+00> : vector<8x32xf32>
    %52 = tpu.matmul %51, %8, %cst_31 {dimension_numbers = #tpu.dot_dimension_numbers<[1], [0], [0], [1], [0, 0, 1, 1], [], []>} : vector<8x32xf32>, vector<32x32xf32>, vector<8x32xf32> -> vector<8x32xf32>
    %53 = vector.extract_strided_slice %5 {offsets = [32, 0], sizes = [8, 32], strides = [1, 1]} : vector<64x32xf32> to vector<8x32xf32>
    %cst_32 = arith.constant dense<0.000000e+00> : vector<8x32xf32>
    %54 = tpu.matmul %46, %6, %cst_32 {dimension_numbers = #tpu.dot_dimension_numbers<[1], [0], [0], [1], [0, 0, 1, 1], [], []>} : vector<8x32xf32>, vector<32x32xf32>, vector<8x32xf32> -> vector<8x32xf32>
    %55 = arith.addf %53, %54 : vector<8x32xf32>
    %cst_33 = arith.constant 0.000000e+00 : f32
    %56 = vector.broadcast %cst_33 : f32 to vector<8x32xf32>
    %57 = arith.maximumf %55, %56 : vector<8x32xf32>
    %cst_34 = arith.constant dense<0.000000e+00> : vector<8x32xf32>
    %58 = tpu.matmul %57, %7, %cst_34 {dimension_numbers = #tpu.dot_dimension_numbers<[1], [0], [0], [1], [0, 0, 1, 1], [], []>} : vector<8x32xf32>, vector<32x32xf32>, vector<8x32xf32> -> vector<8x32xf32>
    %59 = arith.addf %58, %52 : vector<8x32xf32>
    %60 = arith.addf %59, %11 : vector<8x32xf32>
    %cst_35 = arith.constant 0.000000e+00 : f32
    %61 = vector.broadcast %cst_35 : f32 to vector<8x32xf32>
    %62 = arith.maximumf %60, %61 : vector<8x32xf32>
    %cst_36 = arith.constant dense<0.000000e+00> : vector<8x32xf32>
    %63 = tpu.matmul %62, %8, %cst_36 {dimension_numbers = #tpu.dot_dimension_numbers<[1], [0], [0], [1], [0, 0, 1, 1], [], []>} : vector<8x32xf32>, vector<32x32xf32>, vector<8x32xf32> -> vector<8x32xf32>
    %64 = vector.extract_strided_slice %5 {offsets = [40, 0], sizes = [8, 32], strides = [1, 1]} : vector<64x32xf32> to vector<8x32xf32>
    %cst_37 = arith.constant dense<0.000000e+00> : vector<8x32xf32>
    %65 = tpu.matmul %57, %6, %cst_37 {dimension_numbers = #tpu.dot_dimension_numbers<[1], [0], [0], [1], [0, 0, 1, 1], [], []>} : vector<8x32xf32>, vector<32x32xf32>, vector<8x32xf32> -> vector<8x32xf32>
    %66 = arith.addf %64, %65 : vector<8x32xf32>
    %cst_38 = arith.constant 0.000000e+00 : f32
    %67 = vector.broadcast %cst_38 : f32 to vector<8x32xf32>
    %68 = arith.maximumf %66, %67 : vector<8x32xf32>
    %cst_39 = arith.constant dense<0.000000e+00> : vector<8x32xf32>
    %69 = tpu.matmul %68, %7, %cst_39 {dimension_numbers = #tpu.dot_dimension_numbers<[1], [0], [0], [1], [0, 0, 1, 1], [], []>} : vector<8x32xf32>, vector<32x32xf32>, vector<8x32xf32> -> vector<8x32xf32>
    %70 = arith.addf %69, %63 : vector<8x32xf32>
    %71 = arith.addf %70, %11 : vector<8x32xf32>
    %cst_40 = arith.constant 0.000000e+00 : f32
    %72 = vector.broadcast %cst_40 : f32 to vector<8x32xf32>
    %73 = arith.maximumf %71, %72 : vector<8x32xf32>
    %cst_41 = arith.constant dense<0.000000e+00> : vector<8x32xf32>
    %74 = tpu.matmul %73, %8, %cst_41 {dimension_numbers = #tpu.dot_dimension_numbers<[1], [0], [0], [1], [0, 0, 1, 1], [], []>} : vector<8x32xf32>, vector<32x32xf32>, vector<8x32xf32> -> vector<8x32xf32>
    %75 = vector.extract_strided_slice %5 {offsets = [48, 0], sizes = [8, 32], strides = [1, 1]} : vector<64x32xf32> to vector<8x32xf32>
    %cst_42 = arith.constant dense<0.000000e+00> : vector<8x32xf32>
    %76 = tpu.matmul %68, %6, %cst_42 {dimension_numbers = #tpu.dot_dimension_numbers<[1], [0], [0], [1], [0, 0, 1, 1], [], []>} : vector<8x32xf32>, vector<32x32xf32>, vector<8x32xf32> -> vector<8x32xf32>
    %77 = arith.addf %75, %76 : vector<8x32xf32>
    %cst_43 = arith.constant 0.000000e+00 : f32
    %78 = vector.broadcast %cst_43 : f32 to vector<8x32xf32>
    %79 = arith.maximumf %77, %78 : vector<8x32xf32>
    %cst_44 = arith.constant dense<0.000000e+00> : vector<8x32xf32>
    %80 = tpu.matmul %79, %7, %cst_44 {dimension_numbers = #tpu.dot_dimension_numbers<[1], [0], [0], [1], [0, 0, 1, 1], [], []>} : vector<8x32xf32>, vector<32x32xf32>, vector<8x32xf32> -> vector<8x32xf32>
    %81 = arith.addf %80, %74 : vector<8x32xf32>
    %82 = arith.addf %81, %11 : vector<8x32xf32>
    %cst_45 = arith.constant 0.000000e+00 : f32
    %83 = vector.broadcast %cst_45 : f32 to vector<8x32xf32>
    %84 = arith.maximumf %82, %83 : vector<8x32xf32>
    %cst_46 = arith.constant dense<0.000000e+00> : vector<8x32xf32>
    %85 = tpu.matmul %84, %8, %cst_46 {dimension_numbers = #tpu.dot_dimension_numbers<[1], [0], [0], [1], [0, 0, 1, 1], [], []>} : vector<8x32xf32>, vector<32x32xf32>, vector<8x32xf32> -> vector<8x32xf32>
    %86 = vector.extract_strided_slice %5 {offsets = [56, 0], sizes = [8, 32], strides = [1, 1]} : vector<64x32xf32> to vector<8x32xf32>
    %cst_47 = arith.constant dense<0.000000e+00> : vector<8x32xf32>
    %87 = tpu.matmul %79, %6, %cst_47 {dimension_numbers = #tpu.dot_dimension_numbers<[1], [0], [0], [1], [0, 0, 1, 1], [], []>} : vector<8x32xf32>, vector<32x32xf32>, vector<8x32xf32> -> vector<8x32xf32>
    %88 = arith.addf %86, %87 : vector<8x32xf32>
    %cst_48 = arith.constant 0.000000e+00 : f32
    %89 = vector.broadcast %cst_48 : f32 to vector<8x32xf32>
    %90 = arith.maximumf %88, %89 : vector<8x32xf32>
    %cst_49 = arith.constant dense<0.000000e+00> : vector<8x32xf32>
    %91 = tpu.matmul %90, %7, %cst_49 {dimension_numbers = #tpu.dot_dimension_numbers<[1], [0], [0], [1], [0, 0, 1, 1], [], []>} : vector<8x32xf32>, vector<32x32xf32>, vector<8x32xf32> -> vector<8x32xf32>
    %92 = arith.addf %91, %85 : vector<8x32xf32>
    %93 = arith.addf %92, %11 : vector<8x32xf32>
    %cst_50 = arith.constant 0.000000e+00 : f32
    %94 = vector.broadcast %cst_50 : f32 to vector<8x32xf32>
    %95 = arith.maximumf %93, %94 : vector<8x32xf32>
    %c0_51 = arith.constant 0 : index
    %c0_52 = arith.constant 0 : index
    %96 = vector.load %arg7[%c0_51, %c0_52] : memref<32x1xf32, #tpu.memory_space<vmem>>, vector<32x1xf32>
    %cst_53 = arith.constant dense<0.000000e+00> : vector<8x1xf32>
    %97 = tpu.matmul %95, %96, %cst_53 {dimension_numbers = #tpu.dot_dimension_numbers<[1], [0], [0], [1], [0, 0, 1, 1], [], []>} : vector<8x32xf32>, vector<32x1xf32>, vector<8x1xf32> -> vector<8x1xf32>
    %c0_54 = arith.constant 0 : index
    %c0_55 = arith.constant 0 : index
    %98 = vector.load %arg8[%c0_54, %c0_55] : memref<1x1xf32, #tpu.memory_space<vmem>>, vector<1x1xf32>
    %99 = vector.broadcast %98 : vector<1x1xf32> to vector<8x1xf32>
    %100 = arith.addf %97, %99 : vector<8x1xf32>
    %c0_56 = arith.constant 0 : index
    %c0_57 = arith.constant 0 : index
    %101 = vector.load %arg9[%c0_56, %c0_57] : memref<8x1xf32, #tpu.memory_space<vmem>>, vector<8x1xf32>
    tpu.vector_store %arg9[%c0_56, %c0_57], %100 {strides = array<i32>} : memref<8x1xf32, #tpu.memory_space<vmem>>, vector<8x1xf32>,
    return
  }
}

</mosaic_0001>

<llo_original>
// kernel: rnn_model_forward.1
$region0: #{rnn_model_forward.1}
  #allocation0 [shape = 'u32[]', space=smem, size = 0x4, offset = 0x4, fixed_abs, tag = 'smem constant byte address 0x4 - core index']
  #allocation1 [shape = 'u32[144,128]{1,0:T(1,128)}', space=vmem, size = 0x12000, scoped, tag = 'internal scratch']
  #allocation2 [shape = 'f32[1,1]{1,0:T(1,128)S(1)}', space=vmem, size = 0x200, scoped, tag = 'scoped memory for rnn_model_forward.1']
  %s0 = inlined_call_operand.vmem [shape: f32[64,8], index: 0, kind: input, shape index: {}]
  %s1 = inlined_call_operand.vmem [shape: f32[8,32], index: 1, kind: input, shape index: {}]
  %s2 = inlined_call_operand.vmem [shape: f32[32,32], index: 2, kind: input, shape index: {}]
  %s3 = inlined_call_operand.vmem [shape: f32[1,32], index: 3, kind: input, shape index: {}]
  %s4 = inlined_call_operand.vmem [shape: f32[32,32], index: 4, kind: input, shape index: {}]
  %s5 = inlined_call_operand.vmem [shape: f32[32,32], index: 5, kind: input, shape index: {}]
  %s6 = inlined_call_operand.vmem [shape: f32[1,32], index: 6, kind: input, shape index: {}]
  %s7 = inlined_call_operand.vmem [shape: f32[32,1], index: 7, kind: input, shape index: {}]
  %s8 = inlined_call_operand.<no memory space> [shape: f32[1,1], index: 8, kind: input, shape index: {}]
  %s9 = inlined_call_operand.vmem [shape: f32[8,1], index: 9, kind: output, shape index: {}]
  %s10 = sld [smem:[#allocation0]]
  $region46: #{rnn_model_forward.1} parent=0
    _
  %s12 = ssub.s32 1, %s10
  %s13 = scalar_select 0, %s12, %s10
  %v14 = vstv %s8
  %15 = vst [vmem:[#allocation2] sm:$0x1] %v14
  // Predicated region
  $region2: #{rnn_model_forward.1} parent=0 // pred_check
    _
  $region3: #{rnn_model_forward.1} parent=0 // pred_check_branch
    %17 = sbr.rel (0) target = $region5
  $region4: #{rnn_model_forward.1} parent=0 // pred_region
    _
  $region5: #{rnn_model_forward.1} parent=0 // pred_fallthru
    _
  // Predicated region
  $region6: #{rnn_model_forward.1} parent=0 // pred_check
    _
  $region7: #{rnn_model_forward.1} parent=0 // pred_check_branch
    %19 = sbr.rel (0) target = $region9
  $region8: #{rnn_model_forward.1} parent=0 // pred_region
    _
  $region9: #{rnn_model_forward.1} parent=0 // pred_fallthru
    _
  // Predicated region
  $region10: #{rnn_model_forward.1} parent=0 // pred_check
    _
  $region11: #{rnn_model_forward.1} parent=0 // pred_check_branch
    %21 = sbr.rel (0) target = $region13
  $region12: #{rnn_model_forward.1} parent=0 // pred_region
    _
  $region13: #{rnn_model_forward.1} parent=0 // pred_fallthru
    _
  // Predicated region
  $region14: #{rnn_model_forward.1} parent=0 // pred_check
    _
  $region15: #{rnn_model_forward.1} parent=0 // pred_check_branch
    %23 = sbr.rel (0) target = $region17
  $region16: #{rnn_model_forward.1} parent=0 // pred_region
    _
  $region17: #{rnn_model_forward.1} parent=0 // pred_fallthru
    _
  // Predicated region
  $region18: #{rnn_model_forward.1} parent=0 // pred_check
    _
  $region19: #{rnn_model_forward.1} parent=0 // pred_check_branch
    %25 = sbr.rel (0) target = $region21
  $region20: #{rnn_model_forward.1} parent=0 // pred_region
    _
  $region21: #{rnn_model_forward.1} parent=0 // pred_fallthru
    _
  // Predicated region
  $region22: #{rnn_model_forward.1} parent=0 // pred_check
    _
  $region23: #{rnn_model_forward.1} parent=0 // pred_check_branch
    %27 = sbr.rel (0) target = $region25
  $region24: #{rnn_model_forward.1} parent=0 // pred_region
    _
  $region25: #{rnn_model_forward.1} parent=0 // pred_fallthru
    _
  // Predicated region
  $region26: #{rnn_model_forward.1} parent=0 // pred_check
    _
  $region27: #{rnn_model_forward.1} parent=0 // pred_check_branch
    %29 = sbr.rel (0) target = $region29
  $region28: #{rnn_model_forward.1} parent=0 // pred_region
    _
  $region29: #{rnn_model_forward.1} parent=0 // pred_fallthru
    _
  // Predicated region
  $region30: #{rnn_model_forward.1} parent=0 // pred_check
    _
  $region31: #{rnn_model_forward.1} parent=0 // pred_check_branch
    %31 = sbr.rel (0) target = $region33
  $region32: #{rnn_model_forward.1} parent=0 // pred_region
    _
  $region33: #{rnn_model_forward.1} parent=0 // pred_fallthru
    _
  // Predicated region
  $region34: #{rnn_model_forward.1} parent=0 // pred_check
    _
  $region35: #{rnn_model_forward.1} parent=0 // pred_check_branch
    %33 = sbr.rel (0) target = $region37
  $region36: #{rnn_model_forward.1} parent=0 // pred_region
    _
  $region37: #{rnn_model_forward.1} parent=0 // pred_fallthru
    _
  %v34 = vld [vmem:[%s0] sm:$0xff]
  %v35 = vld [vmem:[%s0 + $0x8] sm:$0xff]
  %v36 = vld [vmem:[%s0 + $0x10] sm:$0xff]
  %v37 = vld [vmem:[%s0 + $0x18] sm:$0xff]
  %v38 = vld [vmem:[%s0 + $0x20] sm:$0xff]
  %v39 = vld [vmem:[%s0 + $0x28] sm:$0xff]
  %v40 = vld [vmem:[%s0 + $0x30] sm:$0xff]
  %v41 = vld [vmem:[%s0 + $0x38] sm:$0xff]
  %v42 = vld [vmem:[%s1] sm:$0xff]
  %v43 = vld [vmem:[%s3] sm:$0x1]
  %v45 = vlaneseq
  %v46 = vshrl.u32 %v45, 7
  %v47 = vsub.s32 0, %v46
  %v48 = vrot.slane %v43, %v47
  %vm50 = vcmask 64512
  %v52 = vsel %vm50, %v34, 0
  %v55 = vsel %vm50, %v35, 0
  %v58 = vsel %vm50, %v36, 0
  %v61 = vsel %vm50, %v37, 0
  %v64 = vsel %vm50, %v38, 0
  %v67 = vsel %vm50, %v39, 0
  %v70 = vsel %vm50, %v40, 0
  %v73 = vsel %vm50, %v41, 0
  %75 = vmatprep.subr.mxu0 0.0
  %76 = vmatpush1.msra.mxu0 0.0
  %77 = vmatprep.subr.mxu0 0.0
  %78 = vmatpush1.msra.mxu0 0.0
  %79 = vmatprep.subr.mxu0 0.0
  %80 = vmatpush1.msra.mxu0 0.0
  %81 = vmatprep.subr.mxu0 0.0
  %82 = vmatpush1.msra.mxu0 0.0
  %83 = vmatprep.subr.mxu0 0.0
  %84 = vmatpush1.msra.mxu0 0.0
  %85 = vmatprep.subr.mxu0 0.0
  %86 = vmatpush1.msra.mxu0 0.0
  %87 = vmatprep.subr.mxu0 0.0
  %88 = vmatpush1.msra.mxu0 0.0
  %89 = vmatprep.subr.mxu0 0.0
  %90 = vmatpush1.msra.mxu0 0.0
  %91 = vmatprep.subr.mxu0 0.0
  %92 = vmatpush1.msra.mxu0 0.0
  %93 = vmatprep.subr.mxu0 0.0
  %94 = vmatpush1.msra.mxu0 0.0
  %95 = vmatprep.subr.mxu0 0.0
  %96 = vmatpush1.msra.mxu0 0.0
  %97 = vmatprep.subr.mxu0 0.0
  %98 = vmatpush1.msra.mxu0 0.0
  %99 = vmatprep.subr.mxu0 0.0
  %100 = vmatpush1.msra.mxu0 0.0
  %101 = vmatprep.subr.mxu0 0.0
  %102 = vmatpush1.msra.mxu0 0.0
  %103 = vmatprep.subr.mxu0 0.0
  %104 = vmatpush1.msra.mxu0 0.0
  %105 = vmatprep.subr.mxu0 0.0
  %106 = vmatpush1.msra.mxu0 %v42
  %107 = vmatprep.subr.mxu0 0.0
  %108 = vmatpush2.msra.mxu0 0.0
  %109 = vmatprep.subr.mxu0 0.0
  %110 = vmatpush2.msra.mxu0 0.0
  %111 = vmatprep.subr.mxu0 0.0
  %112 = vmatpush2.msra.mxu0 0.0
  %113 = vmatprep.subr.mxu0 0.0
  %114 = vmatpush2.msra.mxu0 0.0
  %115 = vmatprep.subr.mxu0 0.0
  %116 = vmatpush2.msra.mxu0 0.0
  %117 = vmatprep.subr.mxu0 0.0
  %118 = vmatpush2.msra.mxu0 0.0
  %119 = vmatprep.subr.mxu0 0.0
  %120 = vmatpush2.msra.mxu0 0.0
  %121 = vmatprep.subr.mxu0 0.0
  %122 = vmatpush2.msra.mxu0 0.0
  %123 = vmatprep.subr.mxu0 0.0
  %124 = vmatpush2.msra.mxu0 0.0
  %125 = vmatprep.subr.mxu0 0.0
  %126 = vmatpush2.msra.mxu0 0.0
  %127 = vmatprep.subr.mxu0 0.0
  %128 = vmatpush2.msra.mxu0 0.0
  %129 = vmatprep.subr.mxu0 0.0
  %130 = vmatpush2.msra.mxu0 0.0
  %131 = vmatprep.subr.mxu0 0.0
  %132 = vmatpush2.msra.mxu0 0.0
  %133 = vmatprep.subr.mxu0 0.0
  %134 = vmatpush2.msra.mxu0 0.0
  %135 = vmatprep.subr.mxu0 0.0
  %136 = vmatpush2.msra.mxu0 0.0
  %137 = vmatprep.subr.mxu0 0.0
  %138 = vmatpush2.msra.mxu0 0.0
  %139 = vmatprep.mubr.f32.mxu0 0.0
  %140 = vmatmul.mubr.f32.gmra.mxu0 %v52
  %v141 = vpop.f32.mrf.mxu0
  %v142 = vadd.f32 %v48, %v141
  %v143 = vpop.f32.mrf.mxu0
  %144 = vmatprep.mubr.f32.mxu0 0.0
  %145 = vmatmul.mubr.f32.gmra.mxu0 %v55
  %v146 = vpop.f32.mrf.mxu0
  %v147 = vadd.f32 %v48, %v146
  %v148 = vpop.f32.mrf.mxu0
  %149 = vmatprep.mubr.f32.mxu0 0.0
  %150 = vmatmul.mubr.f32.gmra.mxu0 %v58
  %v151 = vpop.f32.mrf.mxu0
  %v152 = vadd.f32 %v48, %v151
  %v153 = vpop.f32.mrf.mxu0
  %154 = vmatprep.mubr.f32.mxu0 0.0
  %155 = vmatmul.mubr.f32.gmra.mxu0 %v61
  %v156 = vpop.f32.mrf.mxu0
  %v157 = vadd.f32 %v48, %v156
  %v158 = vpop.f32.mrf.mxu0
  %159 = vmatprep.mubr.f32.mxu0 0.0
  %160 = vmatmul.mubr.f32.gmra.mxu0 %v64
  %v161 = vpop.f32.mrf.mxu0
  %v162 = vadd.f32 %v48, %v161
  %v163 = vpop.f32.mrf.mxu0
  %164 = vmatprep.mubr.f32.mxu0 0.0
  %165 = vmatmul.mubr.f32.gmra.mxu0 %v67
  %v166 = vpop.f32.mrf.mxu0
  %v167 = vadd.f32 %v48, %v166
  %v168 = vpop.f32.mrf.mxu0
  %169 = vmatprep.mubr.f32.mxu0 0.0
  %170 = vmatmul.mubr.f32.gmra.mxu0 %v70
  %v171 = vpop.f32.mrf.mxu0
  %v172 = vadd.f32 %v48, %v171
  %v173 = vpop.f32.mrf.mxu0
  %174 = vmatprep.mubr.f32.mxu0 0.0
  %175 = vmatmul.mubr.f32.gmra.mxu0 %v73
  %v176 = vpop.f32.mrf.mxu0
  %v177 = vadd.f32 %v48, %v176
  %v178 = vpop.f32.mrf.mxu0
  %179 = vdwg.mxu0
  %v180 = vld [vmem:[%s2] sm:$0xff]
  %v181 = vld [vmem:[%s2 + $0x8] sm:$0xff]
  %v182 = vld [vmem:[%s2 + $0x10] sm:$0xff]
  %v183 = vld [vmem:[%s2 + $0x18] sm:$0xff]
  %v184 = vld [vmem:[%s4] sm:$0xff]
  %v185 = vld [vmem:[%s4 + $0x8] sm:$0xff]
  %v186 = vld [vmem:[%s4 + $0x10] sm:$0xff]
  %v187 = vld [vmem:[%s4 + $0x18] sm:$0xff]
  %v188 = vld [vmem:[%s5] sm:$0xff]
  %v189 = vld [vmem:[%s5 + $0x8] sm:$0xff]
  %v190 = vld [vmem:[%s5 + $0x10] sm:$0xff]
  %v191 = vld [vmem:[%s5 + $0x18] sm:$0xff]
  %v192 = vld [vmem:[%s6] sm:$0x1]
  %v194 = vlaneseq
  %v195 = vshrl.u32 %v194, 7
  %v196 = vsub.s32 0, %v195
  %v197 = vrot.slane %v192, %v196
  %v199 = vmax.f32 %v142, 0.0
  %vm200 = vcmask 261120
  %v202 = vsel %vm200, %v199, 0
  %204 = vmatprep.subr.mxu0 0.0
  %205 = vmatpush1.msra.mxu0 0.0
  %206 = vmatprep.subr.mxu0 0.0
  %207 = vmatpush1.msra.mxu0 0.0
  %208 = vmatprep.subr.mxu0 0.0
  %209 = vmatpush1.msra.mxu0 0.0
  %210 = vmatprep.subr.mxu0 0.0
  %211 = vmatpush1.msra.mxu0 0.0
  %212 = vmatprep.subr.mxu0 0.0
  %213 = vmatpush1.msra.mxu0 0.0
  %214 = vmatprep.subr.mxu0 0.0
  %215 = vmatpush1.msra.mxu0 0.0
  %216 = vmatprep.subr.mxu0 0.0
  %217 = vmatpush1.msra.mxu0 0.0
  %218 = vmatprep.subr.mxu0 0.0
  %219 = vmatpush1.msra.mxu0 0.0
  %220 = vmatprep.subr.mxu0 0.0
  %221 = vmatpush1.msra.mxu0 0.0
  %222 = vmatprep.subr.mxu0 0.0
  %223 = vmatpush1.msra.mxu0 0.0
  %224 = vmatprep.subr.mxu0 0.0
  %225 = vmatpush1.msra.mxu0 0.0
  %226 = vmatprep.subr.mxu0 0.0
  %227 = vmatpush1.msra.mxu0 0.0
  %228 = vmatprep.subr.mxu0 0.0
  %229 = vmatpush1.msra.mxu0 %v187
  %230 = vmatprep.subr.mxu0 0.0
  %231 = vmatpush1.msra.mxu0 %v186
  %232 = vmatprep.subr.mxu0 0.0
  %233 = vmatpush1.msra.mxu0 %v185
  %234 = vmatprep.subr.mxu0 0.0
  %235 = vmatpush1.msra.mxu0 %v184
  %236 = vmatprep.subr.mxu0 0.0
  %237 = vmatpush2.msra.mxu0 0.0
  %238 = vmatprep.subr.mxu0 0.0
  %239 = vmatpush2.msra.mxu0 0.0
  %240 = vmatprep.subr.mxu0 0.0
  %241 = vmatpush2.msra.mxu0 0.0
  %242 = vmatprep.subr.mxu0 0.0
  %243 = vmatpush2.msra.mxu0 0.0
  %244 = vmatprep.subr.mxu0 0.0
  %245 = vmatpush2.msra.mxu0 0.0
  %246 = vmatprep.subr.mxu0 0.0
  %247 = vmatpush2.msra.mxu0 0.0
  %248 = vmatprep.subr.mxu0 0.0
  %249 = vmatpush2.msra.mxu0 0.0
  %250 = vmatprep.subr.mxu0 0.0
  %251 = vmatpush2.msra.mxu0 0.0
  %252 = vmatprep.subr.mxu0 0.0
  %253 = vmatpush2.msra.mxu0 0.0
  %254 = vmatprep.subr.mxu0 0.0
  %255 = vmatpush2.msra.mxu0 0.0
  %256 = vmatprep.subr.mxu0 0.0
  %257 = vmatpush2.msra.mxu0 0.0
  %258 = vmatprep.subr.mxu0 0.0
  %259 = vmatpush2.msra.mxu0 0.0
  %260 = vmatprep.subr.mxu0 0.0
  %261 = vmatpush2.msra.mxu0 0.0
  %262 = vmatprep.subr.mxu0 0.0
  %263 = vmatpush2.msra.mxu0 0.0
  %264 = vmatprep.subr.mxu0 0.0
  %265 = vmatpush2.msra.mxu0 0.0
  %266 = vmatprep.subr.mxu0 0.0
  %267 = vmatpush2.msra.mxu0 0.0
  %268 = vmatprep.mubr.f32.mxu0 0.0
  %269 = vmatmul.mubr.f32.gmra.mxu0 %v202
  %v270 = vpop.f32.mrf.mxu0
  %v271 = vadd.f32 %v197, %v270
  %v272 = vpop.f32.mrf.mxu0
  %273 = vdwg.mxu0
  %v274 = vmax.f32 %v271, 0.0
  %v276 = vsel %vm200, %v274, 0
  %278 = vmatprep.subr.mxu0 0.0
  %279 = vmatpush1.msra.mxu0 0.0
  %280 = vmatprep.subr.mxu0 0.0
  %281 = vmatpush1.msra.mxu0 0.0
  %282 = vmatprep.subr.mxu0 0.0
  %283 = vmatpush1.msra.mxu0 0.0
  %284 = vmatprep.subr.mxu0 0.0
  %285 = vmatpush1.msra.mxu0 0.0
  %286 = vmatprep.subr.mxu0 0.0
  %287 = vmatpush1.msra.mxu0 0.0
  %288 = vmatprep.subr.mxu0 0.0
  %289 = vmatpush1.msra.mxu0 0.0
  %290 = vmatprep.subr.mxu0 0.0
  %291 = vmatpush1.msra.mxu0 0.0
  %292 = vmatprep.subr.mxu0 0.0
  %293 = vmatpush1.msra.mxu0 0.0
  %294 = vmatprep.subr.mxu0 0.0
  %295 = vmatpush1.msra.mxu0 0.0
  %296 = vmatprep.subr.mxu0 0.0
  %297 = vmatpush1.msra.mxu0 0.0
  %298 = vmatprep.subr.mxu0 0.0
  %299 = vmatpush1.msra.mxu0 0.0
  %300 = vmatprep.subr.mxu0 0.0
  %301 = vmatpush1.msra.mxu0 0.0
  %302 = vmatprep.subr.mxu0 0.0
  %303 = vmatpush1.msra.mxu0 %v191
  %304 = vmatprep.subr.mxu0 0.0
  %305 = vmatpush1.msra.mxu0 %v190
  %306 = vmatprep.subr.mxu0 0.0
  %307 = vmatpush1.msra.mxu0 %v189
  %308 = vmatprep.subr.mxu0 0.0
  %309 = vmatpush1.msra.mxu0 %v188
  %310 = vmatprep.subr.mxu0 0.0
  %311 = vmatpush2.msra.mxu0 0.0
  %312 = vmatprep.subr.mxu0 0.0
  %313 = vmatpush2.msra.mxu0 0.0
  %314 = vmatprep.subr.mxu0 0.0
  %315 = vmatpush2.msra.mxu0 0.0
  %316 = vmatprep.subr.mxu0 0.0
  %317 = vmatpush2.msra.mxu0 0.0
  %318 = vmatprep.subr.mxu0 0.0
  %319 = vmatpush2.msra.mxu0 0.0
  %320 = vmatprep.subr.mxu0 0.0
  %321 = vmatpush2.msra.mxu0 0.0
  %322 = vmatprep.subr.mxu0 0.0
  %323 = vmatpush2.msra.mxu0 0.0
  %324 = vmatprep.subr.mxu0 0.0
  %325 = vmatpush2.msra.mxu0 0.0
  %326 = vmatprep.subr.mxu0 0.0
  %327 = vmatpush2.msra.mxu0 0.0
  %328 = vmatprep.subr.mxu0 0.0
  %329 = vmatpush2.msra.mxu0 0.0
  %330 = vmatprep.subr.mxu0 0.0
  %331 = vmatpush2.msra.mxu0 0.0
  %332 = vmatprep.subr.mxu0 0.0
  %333 = vmatpush2.msra.mxu0 0.0
  %334 = vmatprep.subr.mxu0 0.0
  %335 = vmatpush2.msra.mxu0 0.0
  %336 = vmatprep.subr.mxu0 0.0
  %337 = vmatpush2.msra.mxu0 0.0
  %338 = vmatprep.subr.mxu0 0.0
  %339 = vmatpush2.msra.mxu0 0.0
  %340 = vmatprep.subr.mxu0 0.0
  %341 = vmatpush2.msra.mxu0 0.0
  %342 = vmatprep.mubr.f32.mxu0 0.0
  %343 = vmatmul.mubr.f32.gmra.mxu0 %v276
  %v344 = vpop.f32.mrf.mxu0
  %v345 = vadd.f32 0.0, %v344
  %v346 = vpop.f32.mrf.mxu0
  %347 = vdwg.mxu0
  %348 = vmatprep.subr.mxu0 0.0
  %349 = vmatpush1.msra.mxu0 0.0
  %350 = vmatprep.subr.mxu0 0.0
  %351 = vmatpush1.msra.mxu0 0.0
  %352 = vmatprep.subr.mxu0 0.0
  %353 = vmatpush1.msra.mxu0 0.0
  %354 = vmatprep.subr.mxu0 0.0
  %355 = vmatpush1.msra.mxu0 0.0
  %356 = vmatprep.subr.mxu0 0.0
  %357 = vmatpush1.msra.mxu0 0.0
  %358 = vmatprep.subr.mxu0 0.0
  %359 = vmatpush1.msra.mxu0 0.0
  %360 = vmatprep.subr.mxu0 0.0
  %361 = vmatpush1.msra.mxu0 0.0
  %362 = vmatprep.subr.mxu0 0.0
  %363 = vmatpush1.msra.mxu0 0.0
  %364 = vmatprep.subr.mxu0 0.0
  %365 = vmatpush1.msra.mxu0 0.0
  %366 = vmatprep.subr.mxu0 0.0
  %367 = vmatpush1.msra.mxu0 0.0
  %368 = vmatprep.subr.mxu0 0.0
  %369 = vmatpush1.msra.mxu0 0.0
  %370 = vmatprep.subr.mxu0 0.0
  %371 = vmatpush1.msra.mxu0 0.0
  %372 = vmatprep.subr.mxu0 0.0
  %373 = vmatpush1.msra.mxu0 %v183
  %374 = vmatprep.subr.mxu0 0.0
  %375 = vmatpush1.msra.mxu0 %v182
  %376 = vmatprep.subr.mxu0 0.0
  %377 = vmatpush1.msra.mxu0 %v181
  %378 = vmatprep.subr.mxu0 0.0
  %379 = vmatpush1.msra.mxu0 %v180
  %380 = vmatprep.subr.mxu0 0.0
  %381 = vmatpush2.msra.mxu0 0.0
  %382 = vmatprep.subr.mxu0 0.0
  %383 = vmatpush2.msra.mxu0 0.0
  %384 = vmatprep.subr.mxu0 0.0
  %385 = vmatpush2.msra.mxu0 0.0
  %386 = vmatprep.subr.mxu0 0.0
  %387 = vmatpush2.msra.mxu0 0.0
  %388 = vmatprep.subr.mxu0 0.0
  %389 = vmatpush2.msra.mxu0 0.0
  %390 = vmatprep.subr.mxu0 0.0
  %391 = vmatpush2.msra.mxu0 0.0
  %392 = vmatprep.subr.mxu0 0.0
  %393 = vmatpush2.msra.mxu0 0.0
  %394 = vmatprep.subr.mxu0 0.0
  %395 = vmatpush2.msra.mxu0 0.0
  %396 = vmatprep.subr.mxu0 0.0
  %397 = vmatpush2.msra.mxu0 0.0
  %398 = vmatprep.subr.mxu0 0.0
  %399 = vmatpush2.msra.mxu0 0.0
  %400 = vmatprep.subr.mxu0 0.0
  %401 = vmatpush2.msra.mxu0 0.0
  %402 = vmatprep.subr.mxu0 0.0
  %403 = vmatpush2.msra.mxu0 0.0
  %404 = vmatprep.subr.mxu0 0.0
  %405 = vmatpush2.msra.mxu0 0.0
  %406 = vmatprep.subr.mxu0 0.0
  %407 = vmatpush2.msra.mxu0 0.0
  %408 = vmatprep.subr.mxu0 0.0
  %409 = vmatpush2.msra.mxu0 0.0
  %410 = vmatprep.subr.mxu0 0.0
  %411 = vmatpush2.msra.mxu0 0.0
  %412 = vmatprep.mubr.f32.mxu0 0.0
  %413 = vmatmul.mubr.f32.gmra.mxu0 %v202
  %v414 = vpop.f32.mrf.mxu0
  %v415 = vadd.f32 0.0, %v414
  %v416 = vpop.f32.mrf.mxu0
  %417 = vdwg.mxu0
  %v418 = vadd.f32 %v147, %v415
  %v419 = vmax.f32 %v418, 0.0
  %v421 = vsel %vm200, %v419, 0
  %423 = vmatprep.subr.mxu0 0.0
  %424 = vmatpush1.msra.mxu0 0.0
  %425 = vmatprep.subr.mxu0 0.0
  %426 = vmatpush1.msra.mxu0 0.0
  %427 = vmatprep.subr.mxu0 0.0
  %428 = vmatpush1.msra.mxu0 0.0
  %429 = vmatprep.subr.mxu0 0.0
  %430 = vmatpush1.msra.mxu0 0.0
  %431 = vmatprep.subr.mxu0 0.0
  %432 = vmatpush1.msra.mxu0 0.0
  %433 = vmatprep.subr.mxu0 0.0
  %434 = vmatpush1.msra.mxu0 0.0
  %435 = vmatprep.subr.mxu0 0.0
  %436 = vmatpush1.msra.mxu0 0.0
  %437 = vmatprep.subr.mxu0 0.0
  %438 = vmatpush1.msra.mxu0 0.0
  %439 = vmatprep.subr.mxu0 0.0
  %440 = vmatpush1.msra.mxu0 0.0
  %441 = vmatprep.subr.mxu0 0.0
  %442 = vmatpush1.msra.mxu0 0.0
  %443 = vmatprep.subr.mxu0 0.0
  %444 = vmatpush1.msra.mxu0 0.0
  %445 = vmatprep.subr.mxu0 0.0
  %446 = vmatpush1.msra.mxu0 0.0
  %447 = vmatprep.subr.mxu0 0.0
  %448 = vmatpush1.msra.mxu0 %v187
  %449 = vmatprep.subr.mxu0 0.0
  %450 = vmatpush1.msra.mxu0 %v186
  %451 = vmatprep.subr.mxu0 0.0
  %452 = vmatpush1.msra.mxu0 %v185
  %453 = vmatprep.subr.mxu0 0.0
  %454 = vmatpush1.msra.mxu0 %v184
  %455 = vmatprep.subr.mxu0 0.0
  %456 = vmatpush2.msra.mxu0 0.0
  %457 = vmatprep.subr.mxu0 0.0
  %458 = vmatpush2.msra.mxu0 0.0
  %459 = vmatprep.subr.mxu0 0.0
  %460 = vmatpush2.msra.mxu0 0.0
  %461 = vmatprep.subr.mxu0 0.0
  %462 = vmatpush2.msra.mxu0 0.0
  %463 = vmatprep.subr.mxu0 0.0
  %464 = vmatpush2.msra.mxu0 0.0
  %465 = vmatprep.subr.mxu0 0.0
  %466 = vmatpush2.msra.mxu0 0.0
  %467 = vmatprep.subr.mxu0 0.0
  %468 = vmatpush2.msra.mxu0 0.0
  %469 = vmatprep.subr.mxu0 0.0
  %470 = vmatpush2.msra.mxu0 0.0
  %471 = vmatprep.subr.mxu0 0.0
  %472 = vmatpush2.msra.mxu0 0.0
  %473 = vmatprep.subr.mxu0 0.0
  %474 = vmatpush2.msra.mxu0 0.0
  %475 = vmatprep.subr.mxu0 0.0
  %476 = vmatpush2.msra.mxu0 0.0
  %477 = vmatprep.subr.mxu0 0.0
  %478 = vmatpush2.msra.mxu0 0.0
  %479 = vmatprep.subr.mxu0 0.0
  %480 = vmatpush2.msra.mxu0 0.0
  %481 = vmatprep.subr.mxu0 0.0
  %482 = vmatpush2.msra.mxu0 0.0
  %483 = vmatprep.subr.mxu0 0.0
  %484 = vmatpush2.msra.mxu0 0.0
  %485 = vmatprep.subr.mxu0 0.0
  %486 = vmatpush2.msra.mxu0 0.0
  %487 = vmatprep.mubr.f32.mxu0 0.0
  %488 = vmatmul.mubr.f32.gmra.mxu0 %v421
  %v489 = vpop.f32.mrf.mxu0
  %v490 = vadd.f32 %v345, %v489
  %v491 = vpop.f32.mrf.mxu0
  %492 = vdwg.mxu0
  %v493 = vadd.f32 %v490, %v197
  %v494 = vmax.f32 %v493, 0.0
  %v496 = vsel %vm200, %v494, 0
  %498 = vmatprep.subr.mxu0 0.0
  %499 = vmatpush1.msra.mxu0 0.0
  %500 = vmatprep.subr.mxu0 0.0
  %501 = vmatpush1.msra.mxu0 0.0
  %502 = vmatprep.subr.mxu0 0.0
  %503 = vmatpush1.msra.mxu0 0.0
  %504 = vmatprep.subr.mxu0 0.0
  %505 = vmatpush1.msra.mxu0 0.0
  %506 = vmatprep.subr.mxu0 0.0
  %507 = vmatpush1.msra.mxu0 0.0
  %508 = vmatprep.subr.mxu0 0.0
  %509 = vmatpush1.msra.mxu0 0.0
  %510 = vmatprep.subr.mxu0 0.0
  %511 = vmatpush1.msra.mxu0 0.0
  %512 = vmatprep.subr.mxu0 0.0
  %513 = vmatpush1.msra.mxu0 0.0
  %514 = vmatprep.subr.mxu0 0.0
  %515 = vmatpush1.msra.mxu0 0.0
  %516 = vmatprep.subr.mxu0 0.0
  %517 = vmatpush1.msra.mxu0 0.0
  %518 = vmatprep.subr.mxu0 0.0
  %519 = vmatpush1.msra.mxu0 0.0
  %520 = vmatprep.subr.mxu0 0.0
  %521 = vmatpush1.msra.mxu0 0.0
  %522 = vmatprep.subr.mxu0 0.0
  %523 = vmatpush1.msra.mxu0 %v191
  %524 = vmatprep.subr.mxu0 0.0
  %525 = vmatpush1.msra.mxu0 %v190
  %526 = vmatprep.subr.mxu0 0.0
  %527 = vmatpush1.msra.mxu0 %v189
  %528 = vmatprep.subr.mxu0 0.0
  %529 = vmatpush1.msra.mxu0 %v188
  %530 = vmatprep.subr.mxu0 0.0
  %531 = vmatpush2.msra.mxu0 0.0
  %532 = vmatprep.subr.mxu0 0.0
  %533 = vmatpush2.msra.mxu0 0.0
  %534 = vmatprep.subr.mxu0 0.0
  %535 = vmatpush2.msra.mxu0 0.0
  %536 = vmatprep.subr.mxu0 0.0
  %537 = vmatpush2.msra.mxu0 0.0
  %538 = vmatprep.subr.mxu0 0.0
  %539 = vmatpush2.msra.mxu0 0.0
  %540 = vmatprep.subr.mxu0 0.0
  %541 = vmatpush2.msra.mxu0 0.0
  %542 = vmatprep.subr.mxu0 0.0
  %543 = vmatpush2.msra.mxu0 0.0
  %544 = vmatprep.subr.mxu0 0.0
  %545 = vmatpush2.msra.mxu0 0.0
  %546 = vmatprep.subr.mxu0 0.0
  %547 = vmatpush2.msra.mxu0 0.0
  %548 = vmatprep.subr.mxu0 0.0
  %549 = vmatpush2.msra.mxu0 0.0
  %550 = vmatprep.subr.mxu0 0.0
  %551 = vmatpush2.msra.mxu0 0.0
  %552 = vmatprep.subr.mxu0 0.0
  %553 = vmatpush2.msra.mxu0 0.0
  %554 = vmatprep.subr.mxu0 0.0
  %555 = vmatpush2.msra.mxu0 0.0
  %556 = vmatprep.subr.mxu0 0.0
  %557 = vmatpush2.msra.mxu0 0.0
  %558 = vmatprep.subr.mxu0 0.0
  %559 = vmatpush2.msra.mxu0 0.0
  %560 = vmatprep.subr.mxu0 0.0
  %561 = vmatpush2.msra.mxu0 0.0
  %562 = vmatprep.mubr.f32.mxu0 0.0
  %563 = vmatmul.mubr.f32.gmra.mxu0 %v496
  %v564 = vpop.f32.mrf.mxu0
  %v565 = vadd.f32 0.0, %v564
  %v566 = vpop.f32.mrf.mxu0
  %567 = vdwg.mxu0
  %568 = vmatprep.subr.mxu0 0.0
  %569 = vmatpush1.msra.mxu0 0.0
  %570 = vmatprep.subr.mxu0 0.0
  %571 = vmatpush1.msra.mxu0 0.0
  %572 = vmatprep.subr.mxu0 0.0
  %573 = vmatpush1.msra.mxu0 0.0
  %574 = vmatprep.subr.mxu0 0.0
  %575 = vmatpush1.msra.mxu0 0.0
  %576 = vmatprep.subr.mxu0 0.0
  %577 = vmatpush1.msra.mxu0 0.0
  %578 = vmatprep.subr.mxu0 0.0
  %579 = vmatpush1.msra.mxu0 0.0
  %580 = vmatprep.subr.mxu0 0.0
  %581 = vmatpush1.msra.mxu0 0.0
  %582 = vmatprep.subr.mxu0 0.0
  %583 = vmatpush1.msra.mxu0 0.0
  %584 = vmatprep.subr.mxu0 0.0
  %585 = vmatpush1.msra.mxu0 0.0
  %586 = vmatprep.subr.mxu0 0.0
  %587 = vmatpush1.msra.mxu0 0.0
  %588 = vmatprep.subr.mxu0 0.0
  %589 = vmatpush1.msra.mxu0 0.0
  %590 = vmatprep.subr.mxu0 0.0
  %591 = vmatpush1.msra.mxu0 0.0
  %592 = vmatprep.subr.mxu0 0.0
  %593 = vmatpush1.msra.mxu0 %v183
  %594 = vmatprep.subr.mxu0 0.0
  %595 = vmatpush1.msra.mxu0 %v182
  %596 = vmatprep.subr.mxu0 0.0
  %597 = vmatpush1.msra.mxu0 %v181
  %598 = vmatprep.subr.mxu0 0.0
  %599 = vmatpush1.msra.mxu0 %v180
  %600 = vmatprep.subr.mxu0 0.0
  %601 = vmatpush2.msra.mxu0 0.0
  %602 = vmatprep.subr.mxu0 0.0
  %603 = vmatpush2.msra.mxu0 0.0
  %604 = vmatprep.subr.mxu0 0.0
  %605 = vmatpush2.msra.mxu0 0.0
  %606 = vmatprep.subr.mxu0 0.0
  %607 = vmatpush2.msra.mxu0 0.0
  %608 = vmatprep.subr.mxu0 0.0
  %609 = vmatpush2.msra.mxu0 0.0
  %610 = vmatprep.subr.mxu0 0.0
  %611 = vmatpush2.msra.mxu0 0.0
  %612 = vmatprep.subr.mxu0 0.0
  %613 = vmatpush2.msra.mxu0 0.0
  %614 = vmatprep.subr.mxu0 0.0
  %615 = vmatpush2.msra.mxu0 0.0
  %616 = vmatprep.subr.mxu0 0.0
  %617 = vmatpush2.msra.mxu0 0.0
  %618 = vmatprep.subr.mxu0 0.0
  %619 = vmatpush2.msra.mxu0 0.0
  %620 = vmatprep.subr.mxu0 0.0
  %621 = vmatpush2.msra.mxu0 0.0
  %622 = vmatprep.subr.mxu0 0.0
  %623 = vmatpush2.msra.mxu0 0.0
  %624 = vmatprep.subr.mxu0 0.0
  %625 = vmatpush2.msra.mxu0 0.0
  %626 = vmatprep.subr.mxu0 0.0
  %627 = vmatpush2.msra.mxu0 0.0
  %628 = vmatprep.subr.mxu0 0.0
  %629 = vmatpush2.msra.mxu0 0.0
  %630 = vmatprep.subr.mxu0 0.0
  %631 = vmatpush2.msra.mxu0 0.0
  %632 = vmatprep.mubr.f32.mxu0 0.0
  %633 = vmatmul.mubr.f32.gmra.mxu0 %v421
  %v634 = vpop.f32.mrf.mxu0
  %v635 = vadd.f32 0.0, %v634
  %v636 = vpop.f32.mrf.mxu0
  %637 = vdwg.mxu0
  %v638 = vadd.f32 %v152, %v635
  %v639 = vmax.f32 %v638, 0.0
  %v641 = vsel %vm200, %v639, 0
  %643 = vmatprep.subr.mxu0 0.0
  %644 = vmatpush1.msra.mxu0 0.0
  %645 = vmatprep.subr.mxu0 0.0
  %646 = vmatpush1.msra.mxu0 0.0
  %647 = vmatprep.subr.mxu0 0.0
  %648 = vmatpush1.msra.mxu0 0.0
  %649 = vmatprep.subr.mxu0 0.0
  %650 = vmatpush1.msra.mxu0 0.0
  %651 = vmatprep.subr.mxu0 0.0
  %652 = vmatpush1.msra.mxu0 0.0
  %653 = vmatprep.subr.mxu0 0.0
  %654 = vmatpush1.msra.mxu0 0.0
  %655 = vmatprep.subr.mxu0 0.0
  %656 = vmatpush1.msra.mxu0 0.0
  %657 = vmatprep.subr.mxu0 0.0
  %658 = vmatpush1.msra.mxu0 0.0
  %659 = vmatprep.subr.mxu0 0.0
  %660 = vmatpush1.msra.mxu0 0.0
  %661 = vmatprep.subr.mxu0 0.0
  %662 = vmatpush1.msra.mxu0 0.0
  %663 = vmatprep.subr.mxu0 0.0
  %664 = vmatpush1.msra.mxu0 0.0
  %665 = vmatprep.subr.mxu0 0.0
  %666 = vmatpush1.msra.mxu0 0.0
  %667 = vmatprep.subr.mxu0 0.0
  %668 = vmatpush1.msra.mxu0 %v187
  %669 = vmatprep.subr.mxu0 0.0
  %670 = vmatpush1.msra.mxu0 %v186
  %671 = vmatprep.subr.mxu0 0.0
  %672 = vmatpush1.msra.mxu0 %v185
  %673 = vmatprep.subr.mxu0 0.0
  %674 = vmatpush1.msra.mxu0 %v184
  %675 = vmatprep.subr.mxu0 0.0
  %676 = vmatpush2.msra.mxu0 0.0
  %677 = vmatprep.subr.mxu0 0.0
  %678 = vmatpush2.msra.mxu0 0.0
  %679 = vmatprep.subr.mxu0 0.0
  %680 = vmatpush2.msra.mxu0 0.0
  %681 = vmatprep.subr.mxu0 0.0
  %682 = vmatpush2.msra.mxu0 0.0
  %683 = vmatprep.subr.mxu0 0.0
  %684 = vmatpush2.msra.mxu0 0.0
  %685 = vmatprep.subr.mxu0 0.0
  %686 = vmatpush2.msra.mxu0 0.0
  %687 = vmatprep.subr.mxu0 0.0
  %688 = vmatpush2.msra.mxu0 0.0
  %689 = vmatprep.subr.mxu0 0.0
  %690 = vmatpush2.msra.mxu0 0.0
  %691 = vmatprep.subr.mxu0 0.0
  %692 = vmatpush2.msra.mxu0 0.0
  %693 = vmatprep.subr.mxu0 0.0
  %694 = vmatpush2.msra.mxu0 0.0
  %695 = vmatprep.subr.mxu0 0.0
  %696 = vmatpush2.msra.mxu0 0.0
  %697 = vmatprep.subr.mxu0 0.0
  %698 = vmatpush2.msra.mxu0 0.0
  %699 = vmatprep.subr.mxu0 0.0
  %700 = vmatpush2.msra.mxu0 0.0
  %701 = vmatprep.subr.mxu0 0.0
  %702 = vmatpush2.msra.mxu0 0.0
  %703 = vmatprep.subr.mxu0 0.0
  %704 = vmatpush2.msra.mxu0 0.0
  %705 = vmatprep.subr.mxu0 0.0
  %706 = vmatpush2.msra.mxu0 0.0
  %707 = vmatprep.mubr.f32.mxu0 0.0
  %708 = vmatmul.mubr.f32.gmra.mxu0 %v641
  %v709 = vpop.f32.mrf.mxu0
  %v710 = vadd.f32 %v565, %v709
  %v711 = vpop.f32.mrf.mxu0
  %712 = vdwg.mxu0
  %v713 = vadd.f32 %v710, %v197
  %v714 = vmax.f32 %v713, 0.0
  %v716 = vsel %vm200, %v714, 0
  %718 = vmatprep.subr.mxu0 0.0
  %719 = vmatpush1.msra.mxu0 0.0
  %720 = vmatprep.subr.mxu0 0.0
  %721 = vmatpush1.msra.mxu0 0.0
  %722 = vmatprep.subr.mxu0 0.0
  %723 = vmatpush1.msra.mxu0 0.0
  %724 = vmatprep.subr.mxu0 0.0
  %725 = vmatpush1.msra.mxu0 0.0
  %726 = vmatprep.subr.mxu0 0.0
  %727 = vmatpush1.msra.mxu0 0.0
  %728 = vmatprep.subr.mxu0 0.0
  %729 = vmatpush1.msra.mxu0 0.0
  %730 = vmatprep.subr.mxu0 0.0
  %731 = vmatpush1.msra.mxu0 0.0
  %732 = vmatprep.subr.mxu0 0.0
  %733 = vmatpush1.msra.mxu0 0.0
  %734 = vmatprep.subr.mxu0 0.0
  %735 = vmatpush1.msra.mxu0 0.0
  %736 = vmatprep.subr.mxu0 0.0
  %737 = vmatpush1.msra.mxu0 0.0
  %738 = vmatprep.subr.mxu0 0.0
  %739 = vmatpush1.msra.mxu0 0.0
  %740 = vmatprep.subr.mxu0 0.0
  %741 = vmatpush1.msra.mxu0 0.0
  %742 = vmatprep.subr.mxu0 0.0
  %743 = vmatpush1.msra.mxu0 %v191
  %744 = vmatprep.subr.mxu0 0.0
  %745 = vmatpush1.msra.mxu0 %v190
  %746 = vmatprep.subr.mxu0 0.0
  %747 = vmatpush1.msra.mxu0 %v189
  %748 = vmatprep.subr.mxu0 0.0
  %749 = vmatpush1.msra.mxu0 %v188
  %750 = vmatprep.subr.mxu0 0.0
  %751 = vmatpush2.msra.mxu0 0.0
  %752 = vmatprep.subr.mxu0 0.0
  %753 = vmatpush2.msra.mxu0 0.0
  %754 = vmatprep.subr.mxu0 0.0
  %755 = vmatpush2.msra.mxu0 0.0
  %756 = vmatprep.subr.mxu0 0.0
  %757 = vmatpush2.msra.mxu0 0.0
  %758 = vmatprep.subr.mxu0 0.0
  %759 = vmatpush2.msra.mxu0 0.0
  %760 = vmatprep.subr.mxu0 0.0
  %761 = vmatpush2.msra.mxu0 0.0
  %762 = vmatprep.subr.mxu0 0.0
  %763 = vmatpush2.msra.mxu0 0.0
  %764 = vmatprep.subr.mxu0 0.0
  %765 = vmatpush2.msra.mxu0 0.0
  %766 = vmatprep.subr.mxu0 0.0
  %767 = vmatpush2.msra.mxu0 0.0
  %768 = vmatprep.subr.mxu0 0.0
  %769 = vmatpush2.msra.mxu0 0.0
  %770 = vmatprep.subr.mxu0 0.0
  %771 = vmatpush2.msra.mxu0 0.0
  %772 = vmatprep.subr.mxu0 0.0
  %773 = vmatpush2.msra.mxu0 0.0
  %774 = vmatprep.subr.mxu0 0.0
  %775 = vmatpush2.msra.mxu0 0.0
  %776 = vmatprep.subr.mxu0 0.0
  %777 = vmatpush2.msra.mxu0 0.0
  %778 = vmatprep.subr.mxu0 0.0
  %779 = vmatpush2.msra.mxu0 0.0
  %780 = vmatprep.subr.mxu0 0.0
  %781 = vmatpush2.msra.mxu0 0.0
  %782 = vmatprep.mubr.f32.mxu0 0.0
  %783 = vmatmul.mubr.f32.gmra.mxu0 %v716
  %v784 = vpop.f32.mrf.mxu0
  %v785 = vadd.f32 0.0, %v784
  %v786 = vpop.f32.mrf.mxu0
  %787 = vdwg.mxu0
  %788 = vmatprep.subr.mxu0 0.0
  %789 = vmatpush1.msra.mxu0 0.0
  %790 = vmatprep.subr.mxu0 0.0
  %791 = vmatpush1.msra.mxu0 0.0
  %792 = vmatprep.subr.mxu0 0.0
  %793 = vmatpush1.msra.mxu0 0.0
  %794 = vmatprep.subr.mxu0 0.0
  %795 = vmatpush1.msra.mxu0 0.0
  %796 = vmatprep.subr.mxu0 0.0
  %797 = vmatpush1.msra.mxu0 0.0
  %798 = vmatprep.subr.mxu0 0.0
  %799 = vmatpush1.msra.mxu0 0.0
  %800 = vmatprep.subr.mxu0 0.0
  %801 = vmatpush1.msra.mxu0 0.0
  %802 = vmatprep.subr.mxu0 0.0
  %803 = vmatpush1.msra.mxu0 0.0
  %804 = vmatprep.subr.mxu0 0.0
  %805 = vmatpush1.msra.mxu0 0.0
  %806 = vmatprep.subr.mxu0 0.0
  %807 = vmatpush1.msra.mxu0 0.0
  %808 = vmatprep.subr.mxu0 0.0
  %809 = vmatpush1.msra.mxu0 0.0
  %810 = vmatprep.subr.mxu0 0.0
  %811 = vmatpush1.msra.mxu0 0.0
  %812 = vmatprep.subr.mxu0 0.0
  %813 = vmatpush1.msra.mxu0 %v183
  %814 = vmatprep.subr.mxu0 0.0
  %815 = vmatpush1.msra.mxu0 %v182
  %816 = vmatprep.subr.mxu0 0.0
  %817 = vmatpush1.msra.mxu0 %v181
  %818 = vmatprep.subr.mxu0 0.0
  %819 = vmatpush1.msra.mxu0 %v180
  %820 = vmatprep.subr.mxu0 0.0
  %821 = vmatpush2.msra.mxu0 0.0
  %822 = vmatprep.subr.mxu0 0.0
  %823 = vmatpush2.msra.mxu0 0.0
  %824 = vmatprep.subr.mxu0 0.0
  %825 = vmatpush2.msra.mxu0 0.0
  %826 = vmatprep.subr.mxu0 0.0
  %827 = vmatpush2.msra.mxu0 0.0
  %828 = vmatprep.subr.mxu0 0.0
  %829 = vmatpush2.msra.mxu0 0.0
  %830 = vmatprep.subr.mxu0 0.0
  %831 = vmatpush2.msra.mxu0 0.0
  %832 = vmatprep.subr.mxu0 0.0
  %833 = vmatpush2.msra.mxu0 0.0
  %834 = vmatprep.subr.mxu0 0.0
  %835 = vmatpush2.msra.mxu0 0.0
  %836 = vmatprep.subr.mxu0 0.0
  %837 = vmatpush2.msra.mxu0 0.0
  %838 = vmatprep.subr.mxu0 0.0
  %839 = vmatpush2.msra.mxu0 0.0
  %840 = vmatprep.subr.mxu0 0.0
  %841 = vmatpush2.msra.mxu0 0.0
  %842 = vmatprep.subr.mxu0 0.0
  %843 = vmatpush2.msra.mxu0 0.0
  %844 = vmatprep.subr.mxu0 0.0
  %845 = vmatpush2.msra.mxu0 0.0
  %846 = vmatprep.subr.mxu0 0.0
  %847 = vmatpush2.msra.mxu0 0.0
  %848 = vmatprep.subr.mxu0 0.0
  %849 = vmatpush2.msra.mxu0 0.0
  %850 = vmatprep.subr.mxu0 0.0
  %851 = vmatpush2.msra.mxu0 0.0
  %852 = vmatprep.mubr.f32.mxu0 0.0
  %853 = vmatmul.mubr.f32.gmra.mxu0 %v641
  %v854 = vpop.f32.mrf.mxu0
  %v855 = vadd.f32 0.0, %v854
  %v856 = vpop.f32.mrf.mxu0
  %857 = vdwg.mxu0
  %v858 = vadd.f32 %v157, %v855
  %v859 = vmax.f32 %v858, 0.0
  %v861 = vsel %vm200, %v859, 0
  %863 = vmatprep.subr.mxu0 0.0
  %864 = vmatpush1.msra.mxu0 0.0
  %865 = vmatprep.subr.mxu0 0.0
  %866 = vmatpush1.msra.mxu0 0.0
  %867 = vmatprep.subr.mxu0 0.0
  %868 = vmatpush1.msra.mxu0 0.0
  %869 = vmatprep.subr.mxu0 0.0
  %870 = vmatpush1.msra.mxu0 0.0
  %871 = vmatprep.subr.mxu0 0.0
  %872 = vmatpush1.msra.mxu0 0.0
  %873 = vmatprep.subr.mxu0 0.0
  %874 = vmatpush1.msra.mxu0 0.0
  %875 = vmatprep.subr.mxu0 0.0
  %876 = vmatpush1.msra.mxu0 0.0
  %877 = vmatprep.subr.mxu0 0.0
  %878 = vmatpush1.msra.mxu0 0.0
  %879 = vmatprep.subr.mxu0 0.0
  %880 = vmatpush1.msra.mxu0 0.0
  %881 = vmatprep.subr.mxu0 0.0
  %882 = vmatpush1.msra.mxu0 0.0
  %883 = vmatprep.subr.mxu0 0.0
  %884 = vmatpush1.msra.mxu0 0.0
  %885 = vmatprep.subr.mxu0 0.0
  %886 = vmatpush1.msra.mxu0 0.0
  %887 = vmatprep.subr.mxu0 0.0
  %888 = vmatpush1.msra.mxu0 %v187
  %889 = vmatprep.subr.mxu0 0.0
  %890 = vmatpush1.msra.mxu0 %v186
  %891 = vmatprep.subr.mxu0 0.0
  %892 = vmatpush1.msra.mxu0 %v185
  %893 = vmatprep.subr.mxu0 0.0
  %894 = vmatpush1.msra.mxu0 %v184
  %895 = vmatprep.subr.mxu0 0.0
  %896 = vmatpush2.msra.mxu0 0.0
  %897 = vmatprep.subr.mxu0 0.0
  %898 = vmatpush2.msra.mxu0 0.0
  %899 = vmatprep.subr.mxu0 0.0
  %900 = vmatpush2.msra.mxu0 0.0
  %901 = vmatprep.subr.mxu0 0.0
  %902 = vmatpush2.msra.mxu0 0.0
  %903 = vmatprep.subr.mxu0 0.0
  %904 = vmatpush2.msra.mxu0 0.0
  %905 = vmatprep.subr.mxu0 0.0
  %906 = vmatpush2.msra.mxu0 0.0
  %907 = vmatprep.subr.mxu0 0.0
  %908 = vmatpush2.msra.mxu0 0.0
  %909 = vmatprep.subr.mxu0 0.0
  %910 = vmatpush2.msra.mxu0 0.0
  %911 = vmatprep.subr.mxu0 0.0
  %912 = vmatpush2.msra.mxu0 0.0
  %913 = vmatprep.subr.mxu0 0.0
  %914 = vmatpush2.msra.mxu0 0.0
  %915 = vmatprep.subr.mxu0 0.0
  %916 = vmatpush2.msra.mxu0 0.0
  %917 = vmatprep.subr.mxu0 0.0
  %918 = vmatpush2.msra.mxu0 0.0
  %919 = vmatprep.subr.mxu0 0.0
  %920 = vmatpush2.msra.mxu0 0.0
  %921 = vmatprep.subr.mxu0 0.0
  %922 = vmatpush2.msra.mxu0 0.0
  %923 = vmatprep.subr.mxu0 0.0
  %924 = vmatpush2.msra.mxu0 0.0
  %925 = vmatprep.subr.mxu0 0.0
  %926 = vmatpush2.msra.mxu0 0.0
  %927 = vmatprep.mubr.f32.mxu0 0.0
  %928 = vmatmul.mubr.f32.gmra.mxu0 %v861
  %v929 = vpop.f32.mrf.mxu0
  %v930 = vadd.f32 %v785, %v929
  %v931 = vpop.f32.mrf.mxu0
  %932 = vdwg.mxu0
  %v933 = vadd.f32 %v930, %v197
  %v934 = vmax.f32 %v933, 0.0
  %v936 = vsel %vm200, %v934, 0
  %938 = vmatprep.subr.mxu0 0.0
  %939 = vmatpush1.msra.mxu0 0.0
  %940 = vmatprep.subr.mxu0 0.0
  %941 = vmatpush1.msra.mxu0 0.0
  %942 = vmatprep.subr.mxu0 0.0
  %943 = vmatpush1.msra.mxu0 0.0
  %944 = vmatprep.subr.mxu0 0.0
  %945 = vmatpush1.msra.mxu0 0.0
  %946 = vmatprep.subr.mxu0 0.0
  %947 = vmatpush1.msra.mxu0 0.0
  %948 = vmatprep.subr.mxu0 0.0
  %949 = vmatpush1.msra.mxu0 0.0
  %950 = vmatprep.subr.mxu0 0.0
  %951 = vmatpush1.msra.mxu0 0.0
  %952 = vmatprep.subr.mxu0 0.0
  %953 = vmatpush1.msra.mxu0 0.0
  %954 = vmatprep.subr.mxu0 0.0
  %955 = vmatpush1.msra.mxu0 0.0
  %956 = vmatprep.subr.mxu0 0.0
  %957 = vmatpush1.msra.mxu0 0.0
  %958 = vmatprep.subr.mxu0 0.0
  %959 = vmatpush1.msra.mxu0 0.0
  %960 = vmatprep.subr.mxu0 0.0
  %961 = vmatpush1.msra.mxu0 0.0
  %962 = vmatprep.subr.mxu0 0.0
  %963 = vmatpush1.msra.mxu0 %v191
  %964 = vmatprep.subr.mxu0 0.0
  %965 = vmatpush1.msra.mxu0 %v190
  %966 = vmatprep.subr.mxu0 0.0
  %967 = vmatpush1.msra.mxu0 %v189
  %968 = vmatprep.subr.mxu0 0.0
  %969 = vmatpush1.msra.mxu0 %v188
  %970 = vmatprep.subr.mxu0 0.0
  %971 = vmatpush2.msra.mxu0 0.0
  %972 = vmatprep.subr.mxu0 0.0
  %973 = vmatpush2.msra.mxu0 0.0
  %974 = vmatprep.subr.mxu0 0.0
  %975 = vmatpush2.msra.mxu0 0.0
  %976 = vmatprep.subr.mxu0 0.0
  %977 = vmatpush2.msra.mxu0 0.0
  %978 = vmatprep.subr.mxu0 0.0
  %979 = vmatpush2.msra.mxu0 0.0
  %980 = vmatprep.subr.mxu0 0.0
  %981 = vmatpush2.msra.mxu0 0.0
  %982 = vmatprep.subr.mxu0 0.0
  %983 = vmatpush2.msra.mxu0 0.0
  %984 = vmatprep.subr.mxu0 0.0
  %985 = vmatpush2.msra.mxu0 0.0
  %986 = vmatprep.subr.mxu0 0.0
  %987 = vmatpush2.msra.mxu0 0.0
  %988 = vmatprep.subr.mxu0 0.0
  %989 = vmatpush2.msra.mxu0 0.0
  %990 = vmatprep.subr.mxu0 0.0
  %991 = vmatpush2.msra.mxu0 0.0
  %992 = vmatprep.subr.mxu0 0.0
  %993 = vmatpush2.msra.mxu0 0.0
  %994 = vmatprep.subr.mxu0 0.0
  %995 = vmatpush2.msra.mxu0 0.0
  %996 = vmatprep.subr.mxu0 0.0
  %997 = vmatpush2.msra.mxu0 0.0
  %998 = vmatprep.subr.mxu0 0.0
  %999 = vmatpush2.msra.mxu0 0.0
  %1000 = vmatprep.subr.mxu0 0.0
  %1001 = vmatpush2.msra.mxu0 0.0
  %1002 = vmatprep.mubr.f32.mxu0 0.0
  %1003 = vmatmul.mubr.f32.gmra.mxu0 %v936
  %v1004 = vpop.f32.mrf.mxu0
  %v1005 = vadd.f32 0.0, %v1004
  %v1006 = vpop.f32.mrf.mxu0
  %1007 = vdwg.mxu0
  %1008 = vmatprep.subr.mxu0 0.0
  %1009 = vmatpush1.msra.mxu0 0.0
  %1010 = vmatprep.subr.mxu0 0.0
  %1011 = vmatpush1.msra.mxu0 0.0
  %1012 = vmatprep.subr.mxu0 0.0
  %1013 = vmatpush1.msra.mxu0 0.0
  %1014 = vmatprep.subr.mxu0 0.0
  %1015 = vmatpush1.msra.mxu0 0.0
  %1016 = vmatprep.subr.mxu0 0.0
  %1017 = vmatpush1.msra.mxu0 0.0
  %1018 = vmatprep.subr.mxu0 0.0
  %1019 = vmatpush1.msra.mxu0 0.0
  %1020 = vmatprep.subr.mxu0 0.0
  %1021 = vmatpush1.msra.mxu0 0.0
  %1022 = vmatprep.subr.mxu0 0.0
  %1023 = vmatpush1.msra.mxu0 0.0
  %1024 = vmatprep.subr.mxu0 0.0
  %1025 = vmatpush1.msra.mxu0 0.0
  %1026 = vmatprep.subr.mxu0 0.0
  %1027 = vmatpush1.msra.mxu0 0.0
  %1028 = vmatprep.subr.mxu0 0.0
  %1029 = vmatpush1.msra.mxu0 0.0
  %1030 = vmatprep.subr.mxu0 0.0
  %1031 = vmatpush1.msra.mxu0 0.0
  %1032 = vmatprep.subr.mxu0 0.0
  %1033 = vmatpush1.msra.mxu0 %v183
  %1034 = vmatprep.subr.mxu0 0.0
  %1035 = vmatpush1.msra.mxu0 %v182
  %1036 = vmatprep.subr.mxu0 0.0
  %1037 = vmatpush1.msra.mxu0 %v181
  %1038 = vmatprep.subr.mxu0 0.0
  %1039 = vmatpush1.msra.mxu0 %v180
  %1040 = vmatprep.subr.mxu0 0.0
  %1041 = vmatpush2.msra.mxu0 0.0
  %1042 = vmatprep.subr.mxu0 0.0
  %1043 = vmatpush2.msra.mxu0 0.0
  %1044 = vmatprep.subr.mxu0 0.0
  %1045 = vmatpush2.msra.mxu0 0.0
  %1046 = vmatprep.subr.mxu0 0.0
  %1047 = vmatpush2.msra.mxu0 0.0
  %1048 = vmatprep.subr.mxu0 0.0
  %1049 = vmatpush2.msra.mxu0 0.0
  %1050 = vmatprep.subr.mxu0 0.0
  %1051 = vmatpush2.msra.mxu0 0.0
  %1052 = vmatprep.subr.mxu0 0.0
  %1053 = vmatpush2.msra.mxu0 0.0
  %1054 = vmatprep.subr.mxu0 0.0
  %1055 = vmatpush2.msra.mxu0 0.0
  %1056 = vmatprep.subr.mxu0 0.0
  %1057 = vmatpush2.msra.mxu0 0.0
  %1058 = vmatprep.subr.mxu0 0.0
  %1059 = vmatpush2.msra.mxu0 0.0
  %1060 = vmatprep.subr.mxu0 0.0
  %1061 = vmatpush2.msra.mxu0 0.0
  %1062 = vmatprep.subr.mxu0 0.0
  %1063 = vmatpush2.msra.mxu0 0.0
  %1064 = vmatprep.subr.mxu0 0.0
  %1065 = vmatpush2.msra.mxu0 0.0
  %1066 = vmatprep.subr.mxu0 0.0
  %1067 = vmatpush2.msra.mxu0 0.0
  %1068 = vmatprep.subr.mxu0 0.0
  %1069 = vmatpush2.msra.mxu0 0.0
  %1070 = vmatprep.subr.mxu0 0.0
  %1071 = vmatpush2.msra.mxu0 0.0
  %1072 = vmatprep.mubr.f32.mxu0 0.0
  %1073 = vmatmul.mubr.f32.gmra.mxu0 %v861
  %v1074 = vpop.f32.mrf.mxu0
  %v1075 = vadd.f32 0.0, %v1074
  %v1076 = vpop.f32.mrf.mxu0
  %1077 = vdwg.mxu0
  %v1078 = vadd.f32 %v162, %v1075
  %v1079 = vmax.f32 %v1078, 0.0
  %v1081 = vsel %vm200, %v1079, 0
  %1083 = vmatprep.subr.mxu0 0.0
  %1084 = vmatpush1.msra.mxu0 0.0
  %1085 = vmatprep.subr.mxu0 0.0
  %1086 = vmatpush1.msra.mxu0 0.0
  %1087 = vmatprep.subr.mxu0 0.0
  %1088 = vmatpush1.msra.mxu0 0.0
  %1089 = vmatprep.subr.mxu0 0.0
  %1090 = vmatpush1.msra.mxu0 0.0
  %1091 = vmatprep.subr.mxu0 0.0
  %1092 = vmatpush1.msra.mxu0 0.0
  %1093 = vmatprep.subr.mxu0 0.0
  %1094 = vmatpush1.msra.mxu0 0.0
  %1095 = vmatprep.subr.mxu0 0.0
  %1096 = vmatpush1.msra.mxu0 0.0
  %1097 = vmatprep.subr.mxu0 0.0
  %1098 = vmatpush1.msra.mxu0 0.0
  %1099 = vmatprep.subr.mxu0 0.0
  %1100 = vmatpush1.msra.mxu0 0.0
  %1101 = vmatprep.subr.mxu0 0.0
  %1102 = vmatpush1.msra.mxu0 0.0
  %1103 = vmatprep.subr.mxu0 0.0
  %1104 = vmatpush1.msra.mxu0 0.0
  %1105 = vmatprep.subr.mxu0 0.0
  %1106 = vmatpush1.msra.mxu0 0.0
  %1107 = vmatprep.subr.mxu0 0.0
  %1108 = vmatpush1.msra.mxu0 %v187
  %1109 = vmatprep.subr.mxu0 0.0
  %1110 = vmatpush1.msra.mxu0 %v186
  %1111 = vmatprep.subr.mxu0 0.0
  %1112 = vmatpush1.msra.mxu0 %v185
  %1113 = vmatprep.subr.mxu0 0.0
  %1114 = vmatpush1.msra.mxu0 %v184
  %1115 = vmatprep.subr.mxu0 0.0
  %1116 = vmatpush2.msra.mxu0 0.0
  %1117 = vmatprep.subr.mxu0 0.0
  %1118 = vmatpush2.msra.mxu0 0.0
  %1119 = vmatprep.subr.mxu0 0.0
  %1120 = vmatpush2.msra.mxu0 0.0
  %1121 = vmatprep.subr.mxu0 0.0
  %1122 = vmatpush2.msra.mxu0 0.0
  %1123 = vmatprep.subr.mxu0 0.0
  %1124 = vmatpush2.msra.mxu0 0.0
  %1125 = vmatprep.subr.mxu0 0.0
  %1126 = vmatpush2.msra.mxu0 0.0
  %1127 = vmatprep.subr.mxu0 0.0
  %1128 = vmatpush2.msra.mxu0 0.0
  %1129 = vmatprep.subr.mxu0 0.0
  %1130 = vmatpush2.msra.mxu0 0.0
  %1131 = vmatprep.subr.mxu0 0.0
  %1132 = vmatpush2.msra.mxu0 0.0
  %1133 = vmatprep.subr.mxu0 0.0
  %1134 = vmatpush2.msra.mxu0 0.0
  %1135 = vmatprep.subr.mxu0 0.0
  %1136 = vmatpush2.msra.mxu0 0.0
  %1137 = vmatprep.subr.mxu0 0.0
  %1138 = vmatpush2.msra.mxu0 0.0
  %1139 = vmatprep.subr.mxu0 0.0
  %1140 = vmatpush2.msra.mxu0 0.0
  %1141 = vmatprep.subr.mxu0 0.0
  %1142 = vmatpush2.msra.mxu0 0.0
  %1143 = vmatprep.subr.mxu0 0.0
  %1144 = vmatpush2.msra.mxu0 0.0
  %1145 = vmatprep.subr.mxu0 0.0
  %1146 = vmatpush2.msra.mxu0 0.0
  %1147 = vmatprep.mubr.f32.mxu0 0.0
  %1148 = vmatmul.mubr.f32.gmra.mxu0 %v1081
  %v1149 = vpop.f32.mrf.mxu0
  %v1150 = vadd.f32 %v1005, %v1149
  %v1151 = vpop.f32.mrf.mxu0
  %1152 = vdwg.mxu0
  %v1153 = vadd.f32 %v1150, %v197
  %v1154 = vmax.f32 %v1153, 0.0
  %v1156 = vsel %vm200, %v1154, 0
  %1158 = vmatprep.subr.mxu0 0.0
  %1159 = vmatpush1.msra.mxu0 0.0
  %1160 = vmatprep.subr.mxu0 0.0
  %1161 = vmatpush1.msra.mxu0 0.0
  %1162 = vmatprep.subr.mxu0 0.0
  %1163 = vmatpush1.msra.mxu0 0.0
  %1164 = vmatprep.subr.mxu0 0.0
  %1165 = vmatpush1.msra.mxu0 0.0
  %1166 = vmatprep.subr.mxu0 0.0
  %1167 = vmatpush1.msra.mxu0 0.0
  %1168 = vmatprep.subr.mxu0 0.0
  %1169 = vmatpush1.msra.mxu0 0.0
  %1170 = vmatprep.subr.mxu0 0.0
  %1171 = vmatpush1.msra.mxu0 0.0
  %1172 = vmatprep.subr.mxu0 0.0
  %1173 = vmatpush1.msra.mxu0 0.0
  %1174 = vmatprep.subr.mxu0 0.0
  %1175 = vmatpush1.msra.mxu0 0.0
  %1176 = vmatprep.subr.mxu0 0.0
  %1177 = vmatpush1.msra.mxu0 0.0
  %1178 = vmatprep.subr.mxu0 0.0
  %1179 = vmatpush1.msra.mxu0 0.0
  %1180 = vmatprep.subr.mxu0 0.0
  %1181 = vmatpush1.msra.mxu0 0.0
  %1182 = vmatprep.subr.mxu0 0.0
  %1183 = vmatpush1.msra.mxu0 %v191
  %1184 = vmatprep.subr.mxu0 0.0
  %1185 = vmatpush1.msra.mxu0 %v190
  %1186 = vmatprep.subr.mxu0 0.0
  %1187 = vmatpush1.msra.mxu0 %v189
  %1188 = vmatprep.subr.mxu0 0.0
  %1189 = vmatpush1.msra.mxu0 %v188
  %1190 = vmatprep.subr.mxu0 0.0
  %1191 = vmatpush2.msra.mxu0 0.0
  %1192 = vmatprep.subr.mxu0 0.0
  %1193 = vmatpush2.msra.mxu0 0.0
  %1194 = vmatprep.subr.mxu0 0.0
  %1195 = vmatpush2.msra.mxu0 0.0
  %1196 = vmatprep.subr.mxu0 0.0
  %1197 = vmatpush2.msra.mxu0 0.0
  %1198 = vmatprep.subr.mxu0 0.0
  %1199 = vmatpush2.msra.mxu0 0.0
  %1200 = vmatprep.subr.mxu0 0.0
  %1201 = vmatpush2.msra.mxu0 0.0
  %1202 = vmatprep.subr.mxu0 0.0
  %1203 = vmatpush2.msra.mxu0 0.0
  %1204 = vmatprep.subr.mxu0 0.0
  %1205 = vmatpush2.msra.mxu0 0.0
  %1206 = vmatprep.subr.mxu0 0.0
  %1207 = vmatpush2.msra.mxu0 0.0
  %1208 = vmatprep.subr.mxu0 0.0
  %1209 = vmatpush2.msra.mxu0 0.0
  %1210 = vmatprep.subr.mxu0 0.0
  %1211 = vmatpush2.msra.mxu0 0.0
  %1212 = vmatprep.subr.mxu0 0.0
  %1213 = vmatpush2.msra.mxu0 0.0
  %1214 = vmatprep.subr.mxu0 0.0
  %1215 = vmatpush2.msra.mxu0 0.0
  %1216 = vmatprep.subr.mxu0 0.0
  %1217 = vmatpush2.msra.mxu0 0.0
  %1218 = vmatprep.subr.mxu0 0.0
  %1219 = vmatpush2.msra.mxu0 0.0
  %1220 = vmatprep.subr.mxu0 0.0
  %1221 = vmatpush2.msra.mxu0 0.0
  %1222 = vmatprep.mubr.f32.mxu0 0.0
  %1223 = vmatmul.mubr.f32.gmra.mxu0 %v1156
  %v1224 = vpop.f32.mrf.mxu0
  %v1225 = vadd.f32 0.0, %v1224
  %v1226 = vpop.f32.mrf.mxu0
  %1227 = vdwg.mxu0
  %1228 = vmatprep.subr.mxu0 0.0
  %1229 = vmatpush1.msra.mxu0 0.0
  %1230 = vmatprep.subr.mxu0 0.0
  %1231 = vmatpush1.msra.mxu0 0.0
  %1232 = vmatprep.subr.mxu0 0.0
  %1233 = vmatpush1.msra.mxu0 0.0
  %1234 = vmatprep.subr.mxu0 0.0
  %1235 = vmatpush1.msra.mxu0 0.0
  %1236 = vmatprep.subr.mxu0 0.0
  %1237 = vmatpush1.msra.mxu0 0.0
  %1238 = vmatprep.subr.mxu0 0.0
  %1239 = vmatpush1.msra.mxu0 0.0
  %1240 = vmatprep.subr.mxu0 0.0
  %1241 = vmatpush1.msra.mxu0 0.0
  %1242 = vmatprep.subr.mxu0 0.0
  %1243 = vmatpush1.msra.mxu0 0.0
  %1244 = vmatprep.subr.mxu0 0.0
  %1245 = vmatpush1.msra.mxu0 0.0
  %1246 = vmatprep.subr.mxu0 0.0
  %1247 = vmatpush1.msra.mxu0 0.0
  %1248 = vmatprep.subr.mxu0 0.0
  %1249 = vmatpush1.msra.mxu0 0.0
  %1250 = vmatprep.subr.mxu0 0.0
  %1251 = vmatpush1.msra.mxu0 0.0
  %1252 = vmatprep.subr.mxu0 0.0
  %1253 = vmatpush1.msra.mxu0 %v183
  %1254 = vmatprep.subr.mxu0 0.0
  %1255 = vmatpush1.msra.mxu0 %v182
  %1256 = vmatprep.subr.mxu0 0.0
  %1257 = vmatpush1.msra.mxu0 %v181
  %1258 = vmatprep.subr.mxu0 0.0
  %1259 = vmatpush1.msra.mxu0 %v180
  %1260 = vmatprep.subr.mxu0 0.0
  %1261 = vmatpush2.msra.mxu0 0.0
  %1262 = vmatprep.subr.mxu0 0.0
  %1263 = vmatpush2.msra.mxu0 0.0
  %1264 = vmatprep.subr.mxu0 0.0
  %1265 = vmatpush2.msra.mxu0 0.0
  %1266 = vmatprep.subr.mxu0 0.0
  %1267 = vmatpush2.msra.mxu0 0.0
  %1268 = vmatprep.subr.mxu0 0.0
  %1269 = vmatpush2.msra.mxu0 0.0
  %1270 = vmatprep.subr.mxu0 0.0
  %1271 = vmatpush2.msra.mxu0 0.0
  %1272 = vmatprep.subr.mxu0 0.0
  %1273 = vmatpush2.msra.mxu0 0.0
  %1274 = vmatprep.subr.mxu0 0.0
  %1275 = vmatpush2.msra.mxu0 0.0
  %1276 = vmatprep.subr.mxu0 0.0
  %1277 = vmatpush2.msra.mxu0 0.0
  %1278 = vmatprep.subr.mxu0 0.0
  %1279 = vmatpush2.msra.mxu0 0.0
  %1280 = vmatprep.subr.mxu0 0.0
  %1281 = vmatpush2.msra.mxu0 0.0
  %1282 = vmatprep.subr.mxu0 0.0
  %1283 = vmatpush2.msra.mxu0 0.0
  %1284 = vmatprep.subr.mxu0 0.0
  %1285 = vmatpush2.msra.mxu0 0.0
  %1286 = vmatprep.subr.mxu0 0.0
  %1287 = vmatpush2.msra.mxu0 0.0
  %1288 = vmatprep.subr.mxu0 0.0
  %1289 = vmatpush2.msra.mxu0 0.0
  %1290 = vmatprep.subr.mxu0 0.0
  %1291 = vmatpush2.msra.mxu0 0.0
  %1292 = vmatprep.mubr.f32.mxu0 0.0
  %1293 = vmatmul.mubr.f32.gmra.mxu0 %v1081
  %v1294 = vpop.f32.mrf.mxu0
  %v1295 = vadd.f32 0.0, %v1294
  %v1296 = vpop.f32.mrf.mxu0
  %1297 = vdwg.mxu0
  %v1298 = vadd.f32 %v167, %v1295
  %v1299 = vmax.f32 %v1298, 0.0
  %v1301 = vsel %vm200, %v1299, 0
  %1303 = vmatprep.subr.mxu0 0.0
  %1304 = vmatpush1.msra.mxu0 0.0
  %1305 = vmatprep.subr.mxu0 0.0
  %1306 = vmatpush1.msra.mxu0 0.0
  %1307 = vmatprep.subr.mxu0 0.0
  %1308 = vmatpush1.msra.mxu0 0.0
  %1309 = vmatprep.subr.mxu0 0.0
  %1310 = vmatpush1.msra.mxu0 0.0
  %1311 = vmatprep.subr.mxu0 0.0
  %1312 = vmatpush1.msra.mxu0 0.0
  %1313 = vmatprep.subr.mxu0 0.0
  %1314 = vmatpush1.msra.mxu0 0.0
  %1315 = vmatprep.subr.mxu0 0.0
  %1316 = vmatpush1.msra.mxu0 0.0
  %1317 = vmatprep.subr.mxu0 0.0
  %1318 = vmatpush1.msra.mxu0 0.0
  %1319 = vmatprep.subr.mxu0 0.0
  %1320 = vmatpush1.msra.mxu0 0.0
  %1321 = vmatprep.subr.mxu0 0.0
  %1322 = vmatpush1.msra.mxu0 0.0
  %1323 = vmatprep.subr.mxu0 0.0
  %1324 = vmatpush1.msra.mxu0 0.0
  %1325 = vmatprep.subr.mxu0 0.0
  %1326 = vmatpush1.msra.mxu0 0.0
  %1327 = vmatprep.subr.mxu0 0.0
  %1328 = vmatpush1.msra.mxu0 %v187
  %1329 = vmatprep.subr.mxu0 0.0
  %1330 = vmatpush1.msra.mxu0 %v186
  %1331 = vmatprep.subr.mxu0 0.0
  %1332 = vmatpush1.msra.mxu0 %v185
  %1333 = vmatprep.subr.mxu0 0.0
  %1334 = vmatpush1.msra.mxu0 %v184
  %1335 = vmatprep.subr.mxu0 0.0
  %1336 = vmatpush2.msra.mxu0 0.0
  %1337 = vmatprep.subr.mxu0 0.0
  %1338 = vmatpush2.msra.mxu0 0.0
  %1339 = vmatprep.subr.mxu0 0.0
  %1340 = vmatpush2.msra.mxu0 0.0
  %1341 = vmatprep.subr.mxu0 0.0
  %1342 = vmatpush2.msra.mxu0 0.0
  %1343 = vmatprep.subr.mxu0 0.0
  %1344 = vmatpush2.msra.mxu0 0.0
  %1345 = vmatprep.subr.mxu0 0.0
  %1346 = vmatpush2.msra.mxu0 0.0
  %1347 = vmatprep.subr.mxu0 0.0
  %1348 = vmatpush2.msra.mxu0 0.0
  %1349 = vmatprep.subr.mxu0 0.0
  %1350 = vmatpush2.msra.mxu0 0.0
  %1351 = vmatprep.subr.mxu0 0.0
  %1352 = vmatpush2.msra.mxu0 0.0
  %1353 = vmatprep.subr.mxu0 0.0
  %1354 = vmatpush2.msra.mxu0 0.0
  %1355 = vmatprep.subr.mxu0 0.0
  %1356 = vmatpush2.msra.mxu0 0.0
  %1357 = vmatprep.subr.mxu0 0.0
  %1358 = vmatpush2.msra.mxu0 0.0
  %1359 = vmatprep.subr.mxu0 0.0
  %1360 = vmatpush2.msra.mxu0 0.0
  %1361 = vmatprep.subr.mxu0 0.0
  %1362 = vmatpush2.msra.mxu0 0.0
  %1363 = vmatprep.subr.mxu0 0.0
  %1364 = vmatpush2.msra.mxu0 0.0
  %1365 = vmatprep.subr.mxu0 0.0
  %1366 = vmatpush2.msra.mxu0 0.0
  %1367 = vmatprep.mubr.f32.mxu0 0.0
  %1368 = vmatmul.mubr.f32.gmra.mxu0 %v1301
  %v1369 = vpop.f32.mrf.mxu0
  %v1370 = vadd.f32 %v1225, %v1369
  %v1371 = vpop.f32.mrf.mxu0
  %1372 = vdwg.mxu0
  %v1373 = vadd.f32 %v1370, %v197
  %v1374 = vmax.f32 %v1373, 0.0
  %v1376 = vsel %vm200, %v1374, 0
  %1378 = vmatprep.subr.mxu0 0.0
  %1379 = vmatpush1.msra.mxu0 0.0
  %1380 = vmatprep.subr.mxu0 0.0
  %1381 = vmatpush1.msra.mxu0 0.0
  %1382 = vmatprep.subr.mxu0 0.0
  %1383 = vmatpush1.msra.mxu0 0.0
  %1384 = vmatprep.subr.mxu0 0.0
  %1385 = vmatpush1.msra.mxu0 0.0
  %1386 = vmatprep.subr.mxu0 0.0
  %1387 = vmatpush1.msra.mxu0 0.0
  %1388 = vmatprep.subr.mxu0 0.0
  %1389 = vmatpush1.msra.mxu0 0.0
  %1390 = vmatprep.subr.mxu0 0.0
  %1391 = vmatpush1.msra.mxu0 0.0
  %1392 = vmatprep.subr.mxu0 0.0
  %1393 = vmatpush1.msra.mxu0 0.0
  %1394 = vmatprep.subr.mxu0 0.0
  %1395 = vmatpush1.msra.mxu0 0.0
  %1396 = vmatprep.subr.mxu0 0.0
  %1397 = vmatpush1.msra.mxu0 0.0
  %1398 = vmatprep.subr.mxu0 0.0
  %1399 = vmatpush1.msra.mxu0 0.0
  %1400 = vmatprep.subr.mxu0 0.0
  %1401 = vmatpush1.msra.mxu0 0.0
  %1402 = vmatprep.subr.mxu0 0.0
  %1403 = vmatpush1.msra.mxu0 %v191
  %1404 = vmatprep.subr.mxu0 0.0
  %1405 = vmatpush1.msra.mxu0 %v190
  %1406 = vmatprep.subr.mxu0 0.0
  %1407 = vmatpush1.msra.mxu0 %v189
  %1408 = vmatprep.subr.mxu0 0.0
  %1409 = vmatpush1.msra.mxu0 %v188
  %1410 = vmatprep.subr.mxu0 0.0
  %1411 = vmatpush2.msra.mxu0 0.0
  %1412 = vmatprep.subr.mxu0 0.0
  %1413 = vmatpush2.msra.mxu0 0.0
  %1414 = vmatprep.subr.mxu0 0.0
  %1415 = vmatpush2.msra.mxu0 0.0
  %1416 = vmatprep.subr.mxu0 0.0
  %1417 = vmatpush2.msra.mxu0 0.0
  %1418 = vmatprep.subr.mxu0 0.0
  %1419 = vmatpush2.msra.mxu0 0.0
  %1420 = vmatprep.subr.mxu0 0.0
  %1421 = vmatpush2.msra.mxu0 0.0
  %1422 = vmatprep.subr.mxu0 0.0
  %1423 = vmatpush2.msra.mxu0 0.0
  %1424 = vmatprep.subr.mxu0 0.0
  %1425 = vmatpush2.msra.mxu0 0.0
  %1426 = vmatprep.subr.mxu0 0.0
  %1427 = vmatpush2.msra.mxu0 0.0
  %1428 = vmatprep.subr.mxu0 0.0
  %1429 = vmatpush2.msra.mxu0 0.0
  %1430 = vmatprep.subr.mxu0 0.0
  %1431 = vmatpush2.msra.mxu0 0.0
  %1432 = vmatprep.subr.mxu0 0.0
  %1433 = vmatpush2.msra.mxu0 0.0
  %1434 = vmatprep.subr.mxu0 0.0
  %1435 = vmatpush2.msra.mxu0 0.0
  %1436 = vmatprep.subr.mxu0 0.0
  %1437 = vmatpush2.msra.mxu0 0.0
  %1438 = vmatprep.subr.mxu0 0.0
  %1439 = vmatpush2.msra.mxu0 0.0
  %1440 = vmatprep.subr.mxu0 0.0
  %1441 = vmatpush2.msra.mxu0 0.0
  %1442 = vmatprep.mubr.f32.mxu0 0.0
  %1443 = vmatmul.mubr.f32.gmra.mxu0 %v1376
  %v1444 = vpop.f32.mrf.mxu0
  %v1445 = vadd.f32 0.0, %v1444
  %v1446 = vpop.f32.mrf.mxu0
  %1447 = vdwg.mxu0
  %1448 = vmatprep.subr.mxu0 0.0
  %1449 = vmatpush1.msra.mxu0 0.0
  %1450 = vmatprep.subr.mxu0 0.0
  %1451 = vmatpush1.msra.mxu0 0.0
  %1452 = vmatprep.subr.mxu0 0.0
  %1453 = vmatpush1.msra.mxu0 0.0
  %1454 = vmatprep.subr.mxu0 0.0
  %1455 = vmatpush1.msra.mxu0 0.0
  %1456 = vmatprep.subr.mxu0 0.0
  %1457 = vmatpush1.msra.mxu0 0.0
  %1458 = vmatprep.subr.mxu0 0.0
  %1459 = vmatpush1.msra.mxu0 0.0
  %1460 = vmatprep.subr.mxu0 0.0
  %1461 = vmatpush1.msra.mxu0 0.0
  %1462 = vmatprep.subr.mxu0 0.0
  %1463 = vmatpush1.msra.mxu0 0.0
  %1464 = vmatprep.subr.mxu0 0.0
  %1465 = vmatpush1.msra.mxu0 0.0
  %1466 = vmatprep.subr.mxu0 0.0
  %1467 = vmatpush1.msra.mxu0 0.0
  %1468 = vmatprep.subr.mxu0 0.0
  %1469 = vmatpush1.msra.mxu0 0.0
  %1470 = vmatprep.subr.mxu0 0.0
  %1471 = vmatpush1.msra.mxu0 0.0
  %1472 = vmatprep.subr.mxu0 0.0
  %1473 = vmatpush1.msra.mxu0 %v183
  %1474 = vmatprep.subr.mxu0 0.0
  %1475 = vmatpush1.msra.mxu0 %v182
  %1476 = vmatprep.subr.mxu0 0.0
  %1477 = vmatpush1.msra.mxu0 %v181
  %1478 = vmatprep.subr.mxu0 0.0
  %1479 = vmatpush1.msra.mxu0 %v180
  %1480 = vmatprep.subr.mxu0 0.0
  %1481 = vmatpush2.msra.mxu0 0.0
  %1482 = vmatprep.subr.mxu0 0.0
  %1483 = vmatpush2.msra.mxu0 0.0
  %1484 = vmatprep.subr.mxu0 0.0
  %1485 = vmatpush2.msra.mxu0 0.0
  %1486 = vmatprep.subr.mxu0 0.0
  %1487 = vmatpush2.msra.mxu0 0.0
  %1488 = vmatprep.subr.mxu0 0.0
  %1489 = vmatpush2.msra.mxu0 0.0
  %1490 = vmatprep.subr.mxu0 0.0
  %1491 = vmatpush2.msra.mxu0 0.0
  %1492 = vmatprep.subr.mxu0 0.0
  %1493 = vmatpush2.msra.mxu0 0.0
  %1494 = vmatprep.subr.mxu0 0.0
  %1495 = vmatpush2.msra.mxu0 0.0
  %1496 = vmatprep.subr.mxu0 0.0
  %1497 = vmatpush2.msra.mxu0 0.0
  %1498 = vmatprep.subr.mxu0 0.0
  %1499 = vmatpush2.msra.mxu0 0.0
  %1500 = vmatprep.subr.mxu0 0.0
  %1501 = vmatpush2.msra.mxu0 0.0
  %1502 = vmatprep.subr.mxu0 0.0
  %1503 = vmatpush2.msra.mxu0 0.0
  %1504 = vmatprep.subr.mxu0 0.0
  %1505 = vmatpush2.msra.mxu0 0.0
  %1506 = vmatprep.subr.mxu0 0.0
  %1507 = vmatpush2.msra.mxu0 0.0
  %1508 = vmatprep.subr.mxu0 0.0
  %1509 = vmatpush2.msra.mxu0 0.0
  %1510 = vmatprep.subr.mxu0 0.0
  %1511 = vmatpush2.msra.mxu0 0.0
  %1512 = vmatprep.mubr.f32.mxu0 0.0
  %1513 = vmatmul.mubr.f32.gmra.mxu0 %v1301
  %v1514 = vpop.f32.mrf.mxu0
  %v1515 = vadd.f32 0.0, %v1514
  %v1516 = vpop.f32.mrf.mxu0
  %1517 = vdwg.mxu0
  %v1518 = vadd.f32 %v172, %v1515
  %v1519 = vmax.f32 %v1518, 0.0
  %v1521 = vsel %vm200, %v1519, 0
  %1523 = vmatprep.subr.mxu0 0.0
  %1524 = vmatpush1.msra.mxu0 0.0
  %1525 = vmatprep.subr.mxu0 0.0
  %1526 = vmatpush1.msra.mxu0 0.0
  %1527 = vmatprep.subr.mxu0 0.0
  %1528 = vmatpush1.msra.mxu0 0.0
  %1529 = vmatprep.subr.mxu0 0.0
  %1530 = vmatpush1.msra.mxu0 0.0
  %1531 = vmatprep.subr.mxu0 0.0
  %1532 = vmatpush1.msra.mxu0 0.0
  %1533 = vmatprep.subr.mxu0 0.0
  %1534 = vmatpush1.msra.mxu0 0.0
  %1535 = vmatprep.subr.mxu0 0.0
  %1536 = vmatpush1.msra.mxu0 0.0
  %1537 = vmatprep.subr.mxu0 0.0
  %1538 = vmatpush1.msra.mxu0 0.0
  %1539 = vmatprep.subr.mxu0 0.0
  %1540 = vmatpush1.msra.mxu0 0.0
  %1541 = vmatprep.subr.mxu0 0.0
  %1542 = vmatpush1.msra.mxu0 0.0
  %1543 = vmatprep.subr.mxu0 0.0
  %1544 = vmatpush1.msra.mxu0 0.0
  %1545 = vmatprep.subr.mxu0 0.0
  %1546 = vmatpush1.msra.mxu0 0.0
  %1547 = vmatprep.subr.mxu0 0.0
  %1548 = vmatpush1.msra.mxu0 %v187
  %1549 = vmatprep.subr.mxu0 0.0
  %1550 = vmatpush1.msra.mxu0 %v186
  %1551 = vmatprep.subr.mxu0 0.0
  %1552 = vmatpush1.msra.mxu0 %v185
  %1553 = vmatprep.subr.mxu0 0.0
  %1554 = vmatpush1.msra.mxu0 %v184
  %1555 = vmatprep.subr.mxu0 0.0
  %1556 = vmatpush2.msra.mxu0 0.0
  %1557 = vmatprep.subr.mxu0 0.0
  %1558 = vmatpush2.msra.mxu0 0.0
  %1559 = vmatprep.subr.mxu0 0.0
  %1560 = vmatpush2.msra.mxu0 0.0
  %1561 = vmatprep.subr.mxu0 0.0
  %1562 = vmatpush2.msra.mxu0 0.0
  %1563 = vmatprep.subr.mxu0 0.0
  %1564 = vmatpush2.msra.mxu0 0.0
  %1565 = vmatprep.subr.mxu0 0.0
  %1566 = vmatpush2.msra.mxu0 0.0
  %1567 = vmatprep.subr.mxu0 0.0
  %1568 = vmatpush2.msra.mxu0 0.0
  %1569 = vmatprep.subr.mxu0 0.0
  %1570 = vmatpush2.msra.mxu0 0.0
  %1571 = vmatprep.subr.mxu0 0.0
  %1572 = vmatpush2.msra.mxu0 0.0
  %1573 = vmatprep.subr.mxu0 0.0
  %1574 = vmatpush2.msra.mxu0 0.0
  %1575 = vmatprep.subr.mxu0 0.0
  %1576 = vmatpush2.msra.mxu0 0.0
  %1577 = vmatprep.subr.mxu0 0.0
  %1578 = vmatpush2.msra.mxu0 0.0
  %1579 = vmatprep.subr.mxu0 0.0
  %1580 = vmatpush2.msra.mxu0 0.0
  %1581 = vmatprep.subr.mxu0 0.0
  %1582 = vmatpush2.msra.mxu0 0.0
  %1583 = vmatprep.subr.mxu0 0.0
  %1584 = vmatpush2.msra.mxu0 0.0
  %1585 = vmatprep.subr.mxu0 0.0
  %1586 = vmatpush2.msra.mxu0 0.0
  %1587 = vmatprep.mubr.f32.mxu0 0.0
  %1588 = vmatmul.mubr.f32.gmra.mxu0 %v1521
  %v1589 = vpop.f32.mrf.mxu0
  %v1590 = vadd.f32 %v1445, %v1589
  %v1591 = vpop.f32.mrf.mxu0
  %1592 = vdwg.mxu0
  %v1593 = vadd.f32 %v1590, %v197
  %v1594 = vmax.f32 %v1593, 0.0
  %v1596 = vsel %vm200, %v1594, 0
  %1598 = vmatprep.subr.mxu0 0.0
  %1599 = vmatpush1.msra.mxu0 0.0
  %1600 = vmatprep.subr.mxu0 0.0
  %1601 = vmatpush1.msra.mxu0 0.0
  %1602 = vmatprep.subr.mxu0 0.0
  %1603 = vmatpush1.msra.mxu0 0.0
  %1604 = vmatprep.subr.mxu0 0.0
  %1605 = vmatpush1.msra.mxu0 0.0
  %1606 = vmatprep.subr.mxu0 0.0
  %1607 = vmatpush1.msra.mxu0 0.0
  %1608 = vmatprep.subr.mxu0 0.0
  %1609 = vmatpush1.msra.mxu0 0.0
  %1610 = vmatprep.subr.mxu0 0.0
  %1611 = vmatpush1.msra.mxu0 0.0
  %1612 = vmatprep.subr.mxu0 0.0
  %1613 = vmatpush1.msra.mxu0 0.0
  %1614 = vmatprep.subr.mxu0 0.0
  %1615 = vmatpush1.msra.mxu0 0.0
  %1616 = vmatprep.subr.mxu0 0.0
  %1617 = vmatpush1.msra.mxu0 0.0
  %1618 = vmatprep.subr.mxu0 0.0
  %1619 = vmatpush1.msra.mxu0 0.0
  %1620 = vmatprep.subr.mxu0 0.0
  %1621 = vmatpush1.msra.mxu0 0.0
  %1622 = vmatprep.subr.mxu0 0.0
  %1623 = vmatpush1.msra.mxu0 %v191
  %1624 = vmatprep.subr.mxu0 0.0
  %1625 = vmatpush1.msra.mxu0 %v190
  %1626 = vmatprep.subr.mxu0 0.0
  %1627 = vmatpush1.msra.mxu0 %v189
  %1628 = vmatprep.subr.mxu0 0.0
  %1629 = vmatpush1.msra.mxu0 %v188
  %1630 = vmatprep.subr.mxu0 0.0
  %1631 = vmatpush2.msra.mxu0 0.0
  %1632 = vmatprep.subr.mxu0 0.0
  %1633 = vmatpush2.msra.mxu0 0.0
  %1634 = vmatprep.subr.mxu0 0.0
  %1635 = vmatpush2.msra.mxu0 0.0
  %1636 = vmatprep.subr.mxu0 0.0
  %1637 = vmatpush2.msra.mxu0 0.0
  %1638 = vmatprep.subr.mxu0 0.0
  %1639 = vmatpush2.msra.mxu0 0.0
  %1640 = vmatprep.subr.mxu0 0.0
  %1641 = vmatpush2.msra.mxu0 0.0
  %1642 = vmatprep.subr.mxu0 0.0
  %1643 = vmatpush2.msra.mxu0 0.0
  %1644 = vmatprep.subr.mxu0 0.0
  %1645 = vmatpush2.msra.mxu0 0.0
  %1646 = vmatprep.subr.mxu0 0.0
  %1647 = vmatpush2.msra.mxu0 0.0
  %1648 = vmatprep.subr.mxu0 0.0
  %1649 = vmatpush2.msra.mxu0 0.0
  %1650 = vmatprep.subr.mxu0 0.0
  %1651 = vmatpush2.msra.mxu0 0.0
  %1652 = vmatprep.subr.mxu0 0.0
  %1653 = vmatpush2.msra.mxu0 0.0
  %1654 = vmatprep.subr.mxu0 0.0
  %1655 = vmatpush2.msra.mxu0 0.0
  %1656 = vmatprep.subr.mxu0 0.0
  %1657 = vmatpush2.msra.mxu0 0.0
  %1658 = vmatprep.subr.mxu0 0.0
  %1659 = vmatpush2.msra.mxu0 0.0
  %1660 = vmatprep.subr.mxu0 0.0
  %1661 = vmatpush2.msra.mxu0 0.0
  %1662 = vmatprep.mubr.f32.mxu0 0.0
  %1663 = vmatmul.mubr.f32.gmra.mxu0 %v1596
  %v1664 = vpop.f32.mrf.mxu0
  %v1665 = vadd.f32 0.0, %v1664
  %v1666 = vpop.f32.mrf.mxu0
  %1667 = vdwg.mxu0
  %1668 = vmatprep.subr.mxu0 0.0
  %1669 = vmatpush1.msra.mxu0 0.0
  %1670 = vmatprep.subr.mxu0 0.0
  %1671 = vmatpush1.msra.mxu0 0.0
  %1672 = vmatprep.subr.mxu0 0.0
  %1673 = vmatpush1.msra.mxu0 0.0
  %1674 = vmatprep.subr.mxu0 0.0
  %1675 = vmatpush1.msra.mxu0 0.0
  %1676 = vmatprep.subr.mxu0 0.0
  %1677 = vmatpush1.msra.mxu0 0.0
  %1678 = vmatprep.subr.mxu0 0.0
  %1679 = vmatpush1.msra.mxu0 0.0
  %1680 = vmatprep.subr.mxu0 0.0
  %1681 = vmatpush1.msra.mxu0 0.0
  %1682 = vmatprep.subr.mxu0 0.0
  %1683 = vmatpush1.msra.mxu0 0.0
  %1684 = vmatprep.subr.mxu0 0.0
  %1685 = vmatpush1.msra.mxu0 0.0
  %1686 = vmatprep.subr.mxu0 0.0
  %1687 = vmatpush1.msra.mxu0 0.0
  %1688 = vmatprep.subr.mxu0 0.0
  %1689 = vmatpush1.msra.mxu0 0.0
  %1690 = vmatprep.subr.mxu0 0.0
  %1691 = vmatpush1.msra.mxu0 0.0
  %1692 = vmatprep.subr.mxu0 0.0
  %1693 = vmatpush1.msra.mxu0 %v183
  %1694 = vmatprep.subr.mxu0 0.0
  %1695 = vmatpush1.msra.mxu0 %v182
  %1696 = vmatprep.subr.mxu0 0.0
  %1697 = vmatpush1.msra.mxu0 %v181
  %1698 = vmatprep.subr.mxu0 0.0
  %1699 = vmatpush1.msra.mxu0 %v180
  %1700 = vmatprep.subr.mxu0 0.0
  %1701 = vmatpush2.msra.mxu0 0.0
  %1702 = vmatprep.subr.mxu0 0.0
  %1703 = vmatpush2.msra.mxu0 0.0
  %1704 = vmatprep.subr.mxu0 0.0
  %1705 = vmatpush2.msra.mxu0 0.0
  %1706 = vmatprep.subr.mxu0 0.0
  %1707 = vmatpush2.msra.mxu0 0.0
  %1708 = vmatprep.subr.mxu0 0.0
  %1709 = vmatpush2.msra.mxu0 0.0
  %1710 = vmatprep.subr.mxu0 0.0
  %1711 = vmatpush2.msra.mxu0 0.0
  %1712 = vmatprep.subr.mxu0 0.0
  %1713 = vmatpush2.msra.mxu0 0.0
  %1714 = vmatprep.subr.mxu0 0.0
  %1715 = vmatpush2.msra.mxu0 0.0
  %1716 = vmatprep.subr.mxu0 0.0
  %1717 = vmatpush2.msra.mxu0 0.0
  %1718 = vmatprep.subr.mxu0 0.0
  %1719 = vmatpush2.msra.mxu0 0.0
  %1720 = vmatprep.subr.mxu0 0.0
  %1721 = vmatpush2.msra.mxu0 0.0
  %1722 = vmatprep.subr.mxu0 0.0
  %1723 = vmatpush2.msra.mxu0 0.0
  %1724 = vmatprep.subr.mxu0 0.0
  %1725 = vmatpush2.msra.mxu0 0.0
  %1726 = vmatprep.subr.mxu0 0.0
  %1727 = vmatpush2.msra.mxu0 0.0
  %1728 = vmatprep.subr.mxu0 0.0
  %1729 = vmatpush2.msra.mxu0 0.0
  %1730 = vmatprep.subr.mxu0 0.0
  %1731 = vmatpush2.msra.mxu0 0.0
  %1732 = vmatprep.mubr.f32.mxu0 0.0
  %1733 = vmatmul.mubr.f32.gmra.mxu0 %v1521
  %v1734 = vpop.f32.mrf.mxu0
  %v1735 = vadd.f32 0.0, %v1734
  %v1736 = vpop.f32.mrf.mxu0
  %1737 = vdwg.mxu0
  %v1738 = vadd.f32 %v177, %v1735
  %v1739 = vmax.f32 %v1738, 0.0
  %v1741 = vsel %vm200, %v1739, 0
  %1743 = vmatprep.subr.mxu0 0.0
  %1744 = vmatpush1.msra.mxu0 0.0
  %1745 = vmatprep.subr.mxu0 0.0
  %1746 = vmatpush1.msra.mxu0 0.0
  %1747 = vmatprep.subr.mxu0 0.0
  %1748 = vmatpush1.msra.mxu0 0.0
  %1749 = vmatprep.subr.mxu0 0.0
  %1750 = vmatpush1.msra.mxu0 0.0
  %1751 = vmatprep.subr.mxu0 0.0
  %1752 = vmatpush1.msra.mxu0 0.0
  %1753 = vmatprep.subr.mxu0 0.0
  %1754 = vmatpush1.msra.mxu0 0.0
  %1755 = vmatprep.subr.mxu0 0.0
  %1756 = vmatpush1.msra.mxu0 0.0
  %1757 = vmatprep.subr.mxu0 0.0
  %1758 = vmatpush1.msra.mxu0 0.0
  %1759 = vmatprep.subr.mxu0 0.0
  %1760 = vmatpush1.msra.mxu0 0.0
  %1761 = vmatprep.subr.mxu0 0.0
  %1762 = vmatpush1.msra.mxu0 0.0
  %1763 = vmatprep.subr.mxu0 0.0
  %1764 = vmatpush1.msra.mxu0 0.0
  %1765 = vmatprep.subr.mxu0 0.0
  %1766 = vmatpush1.msra.mxu0 0.0
  %1767 = vmatprep.subr.mxu0 0.0
  %1768 = vmatpush1.msra.mxu0 %v187
  %1769 = vmatprep.subr.mxu0 0.0
  %1770 = vmatpush1.msra.mxu0 %v186
  %1771 = vmatprep.subr.mxu0 0.0
  %1772 = vmatpush1.msra.mxu0 %v185
  %1773 = vmatprep.subr.mxu0 0.0
  %1774 = vmatpush1.msra.mxu0 %v184
  %1775 = vmatprep.subr.mxu0 0.0
  %1776 = vmatpush2.msra.mxu0 0.0
  %1777 = vmatprep.subr.mxu0 0.0
  %1778 = vmatpush2.msra.mxu0 0.0
  %1779 = vmatprep.subr.mxu0 0.0
  %1780 = vmatpush2.msra.mxu0 0.0
  %1781 = vmatprep.subr.mxu0 0.0
  %1782 = vmatpush2.msra.mxu0 0.0
  %1783 = vmatprep.subr.mxu0 0.0
  %1784 = vmatpush2.msra.mxu0 0.0
  %1785 = vmatprep.subr.mxu0 0.0
  %1786 = vmatpush2.msra.mxu0 0.0
  %1787 = vmatprep.subr.mxu0 0.0
  %1788 = vmatpush2.msra.mxu0 0.0
  %1789 = vmatprep.subr.mxu0 0.0
  %1790 = vmatpush2.msra.mxu0 0.0
  %1791 = vmatprep.subr.mxu0 0.0
  %1792 = vmatpush2.msra.mxu0 0.0
  %1793 = vmatprep.subr.mxu0 0.0
  %1794 = vmatpush2.msra.mxu0 0.0
  %1795 = vmatprep.subr.mxu0 0.0
  %1796 = vmatpush2.msra.mxu0 0.0
  %1797 = vmatprep.subr.mxu0 0.0
  %1798 = vmatpush2.msra.mxu0 0.0
  %1799 = vmatprep.subr.mxu0 0.0
  %1800 = vmatpush2.msra.mxu0 0.0
  %1801 = vmatprep.subr.mxu0 0.0
  %1802 = vmatpush2.msra.mxu0 0.0
  %1803 = vmatprep.subr.mxu0 0.0
  %1804 = vmatpush2.msra.mxu0 0.0
  %1805 = vmatprep.subr.mxu0 0.0
  %1806 = vmatpush2.msra.mxu0 0.0
  %1807 = vmatprep.mubr.f32.mxu0 0.0
  %1808 = vmatmul.mubr.f32.gmra.mxu0 %v1741
  %v1809 = vpop.f32.mrf.mxu0
  %v1810 = vadd.f32 %v1665, %v1809
  %v1811 = vpop.f32.mrf.mxu0
  %1812 = vdwg.mxu0
  %v1813 = vadd.f32 %v1810, %v197
  %v1814 = vmax.f32 %v1813, 0.0
  %v1815 = vld [vmem:[%s7] sm:$0xff]
  %v1816 = vld [vmem:[%s7 + $0x8] sm:$0xff]
  %v1817 = vld [vmem:[%s7 + $0x10] sm:$0xff]
  %v1818 = vld [vmem:[%s7 + $0x18] sm:$0xff]
  %v1819 = vld [vmem:[#allocation2] sm:$0x1]
  %v1821 = vlaneseq
  %v1822 = vshrl.u32 %v1821, 7
  %v1823 = vsub.s32 0, %v1822
  %v1824 = vrot.slane %v1819, %v1823
  %v1827 = vsel %vm200, %v1814, 0
  %1829 = vmatprep.subr.mxu0 0.0
  %1830 = vmatpush1.msra.mxu0 0.0
  %1831 = vmatprep.subr.mxu0 0.0
  %1832 = vmatpush1.msra.mxu0 0.0
  %1833 = vmatprep.subr.mxu0 0.0
  %1834 = vmatpush1.msra.mxu0 0.0
  %1835 = vmatprep.subr.mxu0 0.0
  %1836 = vmatpush1.msra.mxu0 0.0
  %1837 = vmatprep.subr.mxu0 0.0
  %1838 = vmatpush1.msra.mxu0 0.0
  %1839 = vmatprep.subr.mxu0 0.0
  %1840 = vmatpush1.msra.mxu0 0.0
  %1841 = vmatprep.subr.mxu0 0.0
  %1842 = vmatpush1.msra.mxu0 0.0
  %1843 = vmatprep.subr.mxu0 0.0
  %1844 = vmatpush1.msra.mxu0 0.0
  %1845 = vmatprep.subr.mxu0 0.0
  %1846 = vmatpush1.msra.mxu0 0.0
  %1847 = vmatprep.subr.mxu0 0.0
  %1848 = vmatpush1.msra.mxu0 0.0
  %1849 = vmatprep.subr.mxu0 0.0
  %1850 = vmatpush1.msra.mxu0 0.0
  %1851 = vmatprep.subr.mxu0 0.0
  %1852 = vmatpush1.msra.mxu0 0.0
  %1853 = vmatprep.subr.mxu0 0.0
  %1854 = vmatpush1.msra.mxu0 %v1818
  %1855 = vmatprep.subr.mxu0 0.0
  %1856 = vmatpush1.msra.mxu0 %v1817
  %1857 = vmatprep.subr.mxu0 0.0
  %1858 = vmatpush1.msra.mxu0 %v1816
  %1859 = vmatprep.subr.mxu0 0.0
  %1860 = vmatpush1.msra.mxu0 %v1815
  %1861 = vmatprep.subr.mxu0 0.0
  %1862 = vmatpush2.msra.mxu0 0.0
  %1863 = vmatprep.subr.mxu0 0.0
  %1864 = vmatpush2.msra.mxu0 0.0
  %1865 = vmatprep.subr.mxu0 0.0
  %1866 = vmatpush2.msra.mxu0 0.0
  %1867 = vmatprep.subr.mxu0 0.0
  %1868 = vmatpush2.msra.mxu0 0.0
  %1869 = vmatprep.subr.mxu0 0.0
  %1870 = vmatpush2.msra.mxu0 0.0
  %1871 = vmatprep.subr.mxu0 0.0
  %1872 = vmatpush2.msra.mxu0 0.0
  %1873 = vmatprep.subr.mxu0 0.0
  %1874 = vmatpush2.msra.mxu0 0.0
  %1875 = vmatprep.subr.mxu0 0.0
  %1876 = vmatpush2.msra.mxu0 0.0
  %1877 = vmatprep.subr.mxu0 0.0
  %1878 = vmatpush2.msra.mxu0 0.0
  %1879 = vmatprep.subr.mxu0 0.0
  %1880 = vmatpush2.msra.mxu0 0.0
  %1881 = vmatprep.subr.mxu0 0.0
  %1882 = vmatpush2.msra.mxu0 0.0
  %1883 = vmatprep.subr.mxu0 0.0
  %1884 = vmatpush2.msra.mxu0 0.0
  %1885 = vmatprep.subr.mxu0 0.0
  %1886 = vmatpush2.msra.mxu0 0.0
  %1887 = vmatprep.subr.mxu0 0.0
  %1888 = vmatpush2.msra.mxu0 0.0
  %1889 = vmatprep.subr.mxu0 0.0
  %1890 = vmatpush2.msra.mxu0 0.0
  %1891 = vmatprep.subr.mxu0 0.0
  %1892 = vmatpush2.msra.mxu0 0.0
  %1893 = vmatprep.mubr.f32.mxu0 0.0
  %1894 = vmatmul.mubr.f32.gmra.mxu0 %v1827
  %v1895 = vpop.f32.mrf.mxu0
  %v1896 = vadd.f32 %v1824, %v1895
  %v1897 = vpop.f32.mrf.mxu0
  %1898 = vdwg.mxu0
  %vm1899 = vcmask 7168
  %1900 = vst.msk [vmem:[%s9] sm:$0xff] %vm1899, %v1896
  // Predicated region
  $region38: #{rnn_model_forward.1} parent=0 // pred_check
    _
  $region39: #{rnn_model_forward.1} parent=0 // pred_check_branch
    %1902 = sbr.rel (0) target = $region41
  $region40: #{rnn_model_forward.1} parent=0 // pred_region
    _
  $region41: #{rnn_model_forward.1} parent=0 // pred_fallthru
    _
  // Predicated region
  $region42: #{rnn_model_forward.1} parent=0 // pred_check
    _
  $region43: #{rnn_model_forward.1} parent=0 // pred_check_branch
    %1904 = sbr.rel (0) target = $region45
  $region44: #{rnn_model_forward.1} parent=0 // pred_region
    _
  $region45: #{rnn_model_forward.1} parent=0 // pred_fallthru
    _

</llo_original>
